<compile_context>
chip_gen: v5e
topology: v5e:2x2
jax: 0.10.0
libtpu: 0.0.40
codegen_flags: <defaults>
</compile_context>

<pallas_src>
import math
import jax
import jax.numpy as jnp
from jax import lax
from jax.experimental import pallas as pl
from jax.experimental.pallas import tpu as pltpu

LN_EPS = 1e-5
_INV_SQRT2 = 1.0 / math.sqrt(2.0)


def _round_up(x, m):
    return ((x + m - 1) // m) * m


def _ffn_kernel(x_ref, g_ref, b_ref, w1_ref, b1_ref, w2_ref, b2_ref,
                o_ref, xn_ref, acc_ref):
    k = pl.program_id(1)
    nk = pl.num_programs(1)

    # --- once per row tile: LayerNorm (f32) + zero the accumulator ---
    @pl.when(k == 0)
    def _():
        x = x_ref[...].astype(jnp.float32)
        mu = jnp.mean(x, axis=-1, keepdims=True)
        var = jnp.mean(jnp.square(x - mu), axis=-1, keepdims=True)
        xn = (x - mu) * lax.rsqrt(var + LN_EPS)
        xn = xn * g_ref[...].astype(jnp.float32) + b_ref[...].astype(jnp.float32)
        xn_ref[...] = xn.astype(xn_ref.dtype)          # cached in matmul dtype
        acc_ref[...] = jnp.zeros_like(acc_ref)

    # --- Linear(dim -> hidden) for this hidden chunk, f32 accumulation on MXU ---
    h = jnp.dot(xn_ref[...], w1_ref[...], preferred_element_type=jnp.float32)
    h = h + b1_ref[...].astype(jnp.float32)

    # --- GELU (exact, erf-based: matches torch.nn.GELU() default) ---
    h = 0.5 * h * (1.0 + lax.erf(h * _INV_SQRT2))

    # --- Linear(hidden -> dim) chunk, accumulated into f32 scratch ---
    acc_ref[...] += jnp.dot(h.astype(w2_ref.dtype), w2_ref[...],
                            preferred_element_type=jnp.float32)

    # --- last hidden chunk: add output bias and write the row tile ---
    @pl.when(k == nk - 1)
    def _():
        y = acc_ref[...] + b2_ref[...].astype(jnp.float32)
        o_ref[...] = y.astype(o_ref.dtype)


def feed_forward(x, params, *, tm=256, th=512):
    """x: (B, S, D). params: ln_gamma/ln_beta (D,), w1 (D,H), b1 (H,), w2 (H,D), b2 (D,)."""
    B, S, D = x.shape
    w1, w2 = params["w1"], params["w2"]
    H = w1.shape[1]
    M = B * S

    # --- tile sizes: (8,128)-aligned, never larger than the (padded) problem ---
    tm_eff = min(_round_up(tm, 8), _round_up(M, 8))
    Mp = _round_up(M, tm_eff)
    th_eff = min(_round_up(th, 128), _round_up(H, 128))
    Hp = _round_up(H, th_eff)

    # --- pad ragged dims with zeros (zero hidden columns contribute nothing) ---
    x2 = x.reshape(M, D)
    if Mp != M:
        x2 = jnp.pad(x2, ((0, Mp - M), (0, 0)))
    g = params["ln_gamma"].reshape(1, D)
    b = params["ln_beta"].reshape(1, D)
    b1 = params["b1"].reshape(1, H)
    b2 = params["b2"].reshape(1, D)
    if Hp != H:
        w1 = jnp.pad(w1, ((0, 0), (0, Hp - H)))
        b1 = jnp.pad(b1, ((0, 0), (0, Hp - H)))
        w2 = jnp.pad(w2, ((0, Hp - H), (0, 0)))

    compute_dtype = w1.dtype                      # bf16 weights -> bf16 MXU path
    n_rows = Mp // tm_eff
    n_k = Hp // th_eff

    # --- VMEM working-set estimate -> scoped limit (headroom, capped for v7x) ---
    it_x = jnp.dtype(x.dtype).itemsize
    it_w = jnp.dtype(w1.dtype).itemsize
    it_c = jnp.dtype(compute_dtype).itemsize
    est = (2 * tm_eff * D * it_x            # x tiles (double-buffered)
           + 2 * tm_eff * D * it_x          # out tiles
           + 2 * D * th_eff * it_w          # streamed W1 chunk
           + 2 * th_eff * D * it_w          # streamed W2 chunk
           + 2 * th_eff * it_w + 6 * D * 4  # biases / LN params
           + tm_eff * D * it_c              # cached LayerNorm output
           + tm_eff * D * 4)                # f32 accumulator
    vmem_limit = int(min(max(2 * est, 32 * 1024 * 1024), 64 * 1024 * 1024))

    cost = pl.CostEstimate(
        flops=4 * Mp * D * Hp,                         # two matmuls
        transcendentals=Mp * Hp,                       # erf per hidden activation
        bytes_accessed=(2 * Mp * D * it_x
                        + n_rows * (2 * D * Hp * it_w + Hp * it_w)
                        + 3 * D * 4),
    )

    out = pl.pallas_call(
        _ffn_kernel,
        out_shape=jax.ShapeDtypeStruct((Mp, D), x.dtype),
        grid_spec=pltpu.PrefetchScalarGridSpec(
            num_scalar_prefetch=0,
            grid=(n_rows, n_k),
            in_specs=[
                pl.BlockSpec((tm_eff, D), lambda i, k: (i, 0)),   # x row tile
                pl.BlockSpec((1, D), lambda i, k: (0, 0)),        # ln gamma
                pl.BlockSpec((1, D), lambda i, k: (0, 0)),        # ln beta
                pl.BlockSpec((D, th_eff), lambda i, k: (0, k)),   # W1 chunk
                pl.BlockSpec((1, th_eff), lambda i, k: (0, k)),   # b1 chunk
                pl.BlockSpec((th_eff, D), lambda i, k: (k, 0)),   # W2 chunk
                pl.BlockSpec((1, D), lambda i, k: (0, 0)),        # b2
            ],
            out_specs=pl.BlockSpec((tm_eff, D), lambda i, k: (i, 0)),
            scratch_shapes=[
                pltpu.VMEM((tm_eff, D), compute_dtype),   # cached LN(x)
                pltpu.VMEM((tm_eff, D), jnp.float32),     # output accumulator
            ],
        ),
        compiler_params=pltpu.CompilerParams(
            dimension_semantics=("parallel", "arbitrary"),
            vmem_limit_bytes=vmem_limit,
        ),
        cost_estimate=cost,
    )(x2, g, b, w1, b1, w2, b2)

    return out[:M].reshape(B, S, D)


def init_params(key, dim, hidden_dim):
    """Deterministic synthetic init (torch-like uniform ranges)."""
    k1, k2, k3, k4 = jax.random.split(key, 4)
    lim1 = 1.0 / math.sqrt(dim)
    lim2 = 1.0 / math.sqrt(hidden_dim)
    return {
        "ln_gamma": jnp.ones((dim,), jnp.float32),
        "ln_beta": jnp.zeros((dim,), jnp.float32),
        # stored as (in, out) so the kernel computes x @ W
        "w1": jax.random.uniform(k1, (dim, hidden_dim), jnp.float32, -lim1, lim1),
        "b1": jax.random.uniform(k2, (hidden_dim,), jnp.float32, -lim1, lim1),
        "w2": jax.random.uniform(k3, (hidden_dim, dim), jnp.float32, -lim2, lim2),
        "b2": jax.random.uniform(k4, (dim,), jnp.float32, -lim2, lim2),
    }


def feed_forward_ref(x, p):
    """Pure-JAX reference (matches torch: LN -> Linear -> exact GELU -> Linear)."""
    mu = jnp.mean(x, axis=-1, keepdims=True)
    var = jnp.mean(jnp.square(x - mu), axis=-1, keepdims=True)
    xn = (x - mu) * lax.rsqrt(var + LN_EPS)
    xn = xn * p["ln_gamma"] + p["ln_beta"]
    h = xn @ p["w1"].astype(jnp.float32) + p["b1"].astype(jnp.float32)
    h = 0.5 * h * (1.0 + lax.erf(h * _INV_SQRT2))
    return h @ p["w2"].astype(jnp.float32) + p["b2"].astype(jnp.float32)


if __name__ == "__main__":
    B, S, D, H = 2, 64, 256, 512
    key = jax.random.PRNGKey(0)
    kx, kp = jax.random.split(key)

    x = jax.random.normal(kx, (B, S, D), jnp.float32)
    params = init_params(kp, D, H)

    # f32 path: small tiles forced so the grid is genuinely multi-step
    # (2 row tiles x 4 hidden chunks) and the accumulator logic is exercised.
    y = feed_forward(x, params, tm=64, th=128)
    y = jax.block_until_ready(y)
    y_ref = feed_forward_ref(x, params)
    assert y.shape == (B, S, D)
    assert jnp.allclose(y, y_ref, atol=1e-4, rtol=1e-4), "f32 mismatch vs reference"

    # bf16-weight path: halved weight traffic, native MXU dtype, f32 accumulation.
    params_bf16 = dict(
        params,
        w1=params["w1"].astype(jnp.bfloat16),
        b1=params["b1"].astype(jnp.bfloat16),
        w2=params["w2"].astype(jnp.bfloat16),
        b2=params["b2"].astype(jnp.bfloat16),
    )
    y16 = feed_forward(x, params_bf16, tm=64, th=128)
    y16 = jax.block_until_ready(y16)
    y16_ref = feed_forward_ref(x, params_bf16)   # reference upcasts same bf16 weights
    assert jnp.allclose(y16, y16_ref, atol=5e-2, rtol=5e-2), "bf16 mismatch vs reference"

    print("KERNEL_OK")
</pallas_src>

<mosaic_0001>
module attributes {stable_mosaic.version = 11 : i64} {
  func.func @_ffn_kernel(%arg0: i32, %arg1: i32, %arg2: memref<64x256xf32, #tpu.memory_space<vmem>>, %arg3: memref<1x256xf32, #tpu.memory_space<vmem>>, %arg4: memref<1x256xf32, #tpu.memory_space<vmem>>, %arg5: memref<256x128xf32, #tpu.memory_space<vmem>>, %arg6: memref<1x128xf32, #tpu.memory_space<vmem>>, %arg7: memref<128x256xf32, #tpu.memory_space<vmem>>, %arg8: memref<1x256xf32, #tpu.memory_space<vmem>>, %arg9: memref<64x256xf32, #tpu.memory_space<vmem>>, %arg10: memref<64x256xf32, #tpu.memory_space<vmem>>, %arg11: memref<64x256xf32, #tpu.memory_space<vmem>>) attributes {dimension_semantics = [#tpu.dimension_semantics<parallel>, #tpu.dimension_semantics<arbitrary>], iteration_bounds = array<i64: 2, 4>, scalar_prefetch = 0 : i64, scratch_operands = 2 : i64, tpu.core_type = #tpu.core_type<tc>, window_params = [{transform_indices = @transform_0, window_bounds = array<i64: 64, 256>}, {pipeline_mode = #tpu.pipeline_mode<synchronous>, transform_indices = @transform_1, window_bounds = array<i64: 1, 256>}, {pipeline_mode = #tpu.pipeline_mode<synchronous>, transform_indices = @transform_2, window_bounds = array<i64: 1, 256>}, {transform_indices = @transform_3, window_bounds = array<i64: 256, 128>}, {transform_indices = @transform_4, window_bounds = array<i64: 1, 128>}, {transform_indices = @transform_5, window_bounds = array<i64: 128, 256>}, {pipeline_mode = #tpu.pipeline_mode<synchronous>, transform_indices = @transform_6, window_bounds = array<i64: 1, 256>}, {transform_indices = @transform_7, window_bounds = array<i64: 64, 256>}]} {
    %c0_i32 = arith.constant 0 : i32
    %0 = arith.cmpi eq, %arg1, %c0_i32 : i32
    %1 = arith.extui %0 : i1 to i32
    %c0_i32_0 = arith.constant 0 : i32
    %2 = arith.cmpi ne, %1, %c0_i32_0 : i32
    scf.if %2 {
      %c0_17 = arith.constant 0 : index
      %c0_18 = arith.constant 0 : index
      %25 = vector.load %arg2[%c0_17, %c0_18] : memref<64x256xf32, #tpu.memory_space<vmem>>, vector<64x256xf32>
      %cst_19 = arith.constant dense<0.000000e+00> : vector<64xf32>
      %26 = vector.multi_reduction <add>, %25, %cst_19 [1] : vector<64x256xf32> to vector<64xf32>
      %27 = vector.shape_cast %26 : vector<64xf32> to vector<64x1xf32>
      %cst_20 = arith.constant 2.560000e+02 : f32
      %28 = vector.broadcast %cst_20 : f32 to vector<64x1xf32>
      %29 = arith.divf %27, %28 : vector<64x1xf32>
      %30 = vector.broadcast %29 : vector<64x1xf32> to vector<64x256xf32>
      %31 = arith.subf %25, %30 : vector<64x256xf32>
      %32 = arith.mulf %31, %31 : vector<64x256xf32>
      %cst_21 = arith.constant dense<0.000000e+00> : vector<64xf32>
      %33 = vector.multi_reduction <add>, %32, %cst_21 [1] : vector<64x256xf32> to vector<64xf32>
      %34 = vector.shape_cast %33 : vector<64xf32> to vector<64x1xf32>
      %cst_22 = arith.constant 2.560000e+02 : f32
      %35 = vector.broadcast %cst_22 : f32 to vector<64x1xf32>
      %36 = arith.divf %34, %35 : vector<64x1xf32>
      %37 = vector.broadcast %29 : vector<64x1xf32> to vector<64x256xf32>
      %38 = arith.subf %25, %37 : vector<64x256xf32>
      %cst_23 = arith.constant 9.99999974E-6 : f32
      %39 = vector.broadcast %cst_23 : f32 to vector<64x1xf32>
      %40 = arith.addf %36, %39 : vector<64x1xf32>
      %41 = math.rsqrt %40 : vector<64x1xf32>
      %42 = vector.broadcast %41 : vector<64x1xf32> to vector<64x256xf32>
      %43 = arith.mulf %38, %42 : vector<64x256xf32>
      %c0_24 = arith.constant 0 : index
      %c0_25 = arith.constant 0 : index
      %44 = vector.load %arg3[%c0_24, %c0_25] : memref<1x256xf32, #tpu.memory_space<vmem>>, vector<1x256xf32>
      %45 = vector.broadcast %44 : vector<1x256xf32> to vector<64x256xf32>
      %46 = arith.mulf %43, %45 : vector<64x256xf32>
      %c0_26 = arith.constant 0 : index
      %c0_27 = arith.constant 0 : index
      %47 = vector.load %arg4[%c0_26, %c0_27] : memref<1x256xf32, #tpu.memory_space<vmem>>, vector<1x256xf32>
      %48 = vector.broadcast %47 : vector<1x256xf32> to vector<64x256xf32>
      %49 = arith.addf %46, %48 : vector<64x256xf32>
      %c0_28 = arith.constant 0 : index
      %c0_29 = arith.constant 0 : index
      %50 = vector.load %arg10[%c0_28, %c0_29] : memref<64x256xf32, #tpu.memory_space<vmem>>, vector<64x256xf32>
      tpu.vector_store %arg10[%c0_28, %c0_29], %49 {strides = array<i32>} : memref<64x256xf32, #tpu.memory_space<vmem>>, vector<64x256xf32>,
      %cst_30 = arith.constant 0.000000e+00 : f32
      %51 = vector.broadcast %cst_30 : f32 to vector<64x256xf32>
      %c0_31 = arith.constant 0 : index
      %c0_32 = arith.constant 0 : index
      %52 = vector.load %arg11[%c0_31, %c0_32] : memref<64x256xf32, #tpu.memory_space<vmem>>, vector<64x256xf32>
      tpu.vector_store %arg11[%c0_31, %c0_32], %51 {strides = array<i32>} : memref<64x256xf32, #tpu.memory_space<vmem>>, vector<64x256xf32>,
    } else {
    }
    %c0 = arith.constant 0 : index
    %c0_1 = arith.constant 0 : index
    %3 = vector.load %arg10[%c0, %c0_1] : memref<64x256xf32, #tpu.memory_space<vmem>>, vector<64x256xf32>
    %c0_2 = arith.constant 0 : index
    %c0_3 = arith.constant 0 : index
    %4 = vector.load %arg5[%c0_2, %c0_3] : memref<256x128xf32, #tpu.memory_space<vmem>>, vector<256x128xf32>
    %cst = arith.constant dense<0.000000e+00> : vector<64x128xf32>
    %5 = tpu.matmul %3, %4, %cst {dimension_numbers = #tpu.dot_dimension_numbers<[1], [0], [0], [1], [0, 0, 1, 1], [], []>} : vector<64x256xf32>, vector<256x128xf32>, vector<64x128xf32> -> vector<64x128xf32>
    %c0_4 = arith.constant 0 : index
    %c0_5 = arith.constant 0 : index
    %6 = vector.load %arg6[%c0_4, %c0_5] : memref<1x128xf32, #tpu.memory_space<vmem>>, vector<1x128xf32>
    %7 = vector.broadcast %6 : vector<1x128xf32> to vector<64x128xf32>
    %8 = arith.addf %5, %7 : vector<64x128xf32>
    %cst_6 = arith.constant 5.000000e-01 : f32
    %9 = vector.broadcast %cst_6 : f32 to vector<64x128xf32>
    %10 = arith.mulf %9, %8 : vector<64x128xf32>
    %cst_7 = arith.constant 0.707106769 : f32
    %11 = vector.broadcast %cst_7 : f32 to vector<64x128xf32>
    %12 = arith.mulf %8, %11 : vector<64x128xf32>
    %13 = math.erf %12 : vector<64x128xf32>
    %cst_8 = arith.constant 1.000000e+00 : f32
    %14 = vector.broadcast %cst_8 : f32 to vector<64x128xf32>
    %15 = arith.addf %14, %13 : vector<64x128xf32>
    %16 = arith.mulf %10, %15 : vector<64x128xf32>
    %c0_9 = arith.constant 0 : index
    %c0_10 = arith.constant 0 : index
    %17 = vector.load %arg11[%c0_9, %c0_10] : memref<64x256xf32, #tpu.memory_space<vmem>>, vector<64x256xf32>
    %c0_11 = arith.constant 0 : index
    %c0_12 = arith.constant 0 : index
    %18 = vector.load %arg7[%c0_11, %c0_12] : memref<128x256xf32, #tpu.memory_space<vmem>>, vector<128x256xf32>
    %cst_13 = arith.constant dense<0.000000e+00> : vector<64x256xf32>
    %19 = tpu.matmul %16, %18, %cst_13 {dimension_numbers = #tpu.dot_dimension_numbers<[1], [0], [0], [1], [0, 0, 1, 1], [], []>} : vector<64x128xf32>, vector<128x256xf32>, vector<64x256xf32> -> vector<64x256xf32>
    %20 = arith.addf %17, %19 : vector<64x256xf32>
    %c0_14 = arith.constant 0 : index
    %c0_15 = arith.constant 0 : index
    %21 = vector.load %arg11[%c0_14, %c0_15] : memref<64x256xf32, #tpu.memory_space<vmem>>, vector<64x256xf32>
    tpu.vector_store %arg11[%c0_14, %c0_15], %20 {strides = array<i32>} : memref<64x256xf32, #tpu.memory_space<vmem>>, vector<64x256xf32>,
    %c3_i32 = arith.constant 3 : i32
    %22 = arith.cmpi eq, %arg1, %c3_i32 : i32
    %23 = arith.extui %22 : i1 to i32
    %c0_i32_16 = arith.constant 0 : i32
    %24 = arith.cmpi ne, %23, %c0_i32_16 : i32
    scf.if %24 {
      %c0_17 = arith.constant 0 : index
      %c0_18 = arith.constant 0 : index
      %25 = vector.load %arg11[%c0_17, %c0_18] : memref<64x256xf32, #tpu.memory_space<vmem>>, vector<64x256xf32>
      %c0_19 = arith.constant 0 : index
      %c0_20 = arith.constant 0 : index
      %26 = vector.load %arg8[%c0_19, %c0_20] : memref<1x256xf32, #tpu.memory_space<vmem>>, vector<1x256xf32>
      %27 = vector.broadcast %26 : vector<1x256xf32> to vector<64x256xf32>
      %28 = arith.addf %25, %27 : vector<64x256xf32>
      %c0_21 = arith.constant 0 : index
      %c0_22 = arith.constant 0 : index
      %29 = vector.load %arg9[%c0_21, %c0_22] : memref<64x256xf32, #tpu.memory_space<vmem>>, vector<64x256xf32>
      tpu.vector_store %arg9[%c0_21, %c0_22], %28 {strides = array<i32>} : memref<64x256xf32, #tpu.memory_space<vmem>>, vector<64x256xf32>,
    } else {
    }
    return
  }
  func.func @transform_0(%arg0: i32, %arg1: i32) -> (i32, i32) {
    %c0_i32 = arith.constant 0 : i32
    %c0_i32_0 = arith.constant 0 : i32
    return %arg0, %c0_i32 : i32, i32
  }
  func.func @transform_1(%arg0: i32, %arg1: i32) -> (i32, i32) {
    %c0_i32 = arith.constant 0 : i32
    %c0_i32_0 = arith.constant 0 : i32
    %c0_i32_1 = arith.constant 0 : i32
    return %c0_i32, %c0_i32_0 : i32, i32
  }
  func.func @transform_2(%arg0: i32, %arg1: i32) -> (i32, i32) {
    %c0_i32 = arith.constant 0 : i32
    %c0_i32_0 = arith.constant 0 : i32
    %c0_i32_1 = arith.constant 0 : i32
    return %c0_i32, %c0_i32_0 : i32, i32
  }
  func.func @transform_3(%arg0: i32, %arg1: i32) -> (i32, i32) {
    %c0_i32 = arith.constant 0 : i32
    %c0_i32_0 = arith.constant 0 : i32
    return %c0_i32, %arg1 : i32, i32
  }
  func.func @transform_4(%arg0: i32, %arg1: i32) -> (i32, i32) {
    %c0_i32 = arith.constant 0 : i32
    %c0_i32_0 = arith.constant 0 : i32
    return %c0_i32, %arg1 : i32, i32
  }
  func.func @transform_5(%arg0: i32, %arg1: i32) -> (i32, i32) {
    %c0_i32 = arith.constant 0 : i32
    %c0_i32_0 = arith.constant 0 : i32
    return %arg1, %c0_i32 : i32, i32
  }
  func.func @transform_6(%arg0: i32, %arg1: i32) -> (i32, i32) {
    %c0_i32 = arith.constant 0 : i32
    %c0_i32_0 = arith.constant 0 : i32
    %c0_i32_1 = arith.constant 0 : i32
    return %c0_i32, %c0_i32_0 : i32, i32
  }
  func.func @transform_7(%arg0: i32, %arg1: i32) -> (i32, i32) {
    %c0_i32 = arith.constant 0 : i32
    %c0_i32_0 = arith.constant 0 : i32
    return %arg0, %c0_i32 : i32, i32
  }
}

</mosaic_0001>

<llo_original>
// kernel: tpu_custom_call.1
$region0: #{tpu_custom_call.1}
  #allocation0 [shape = 'u32[]', space=smem, size = 0x4, offset = 0x4, fixed_abs, tag = 'smem constant byte address 0x4 - core index']
  #allocation1 [shape = 'u32[72,128]{1,0:T(1,128)}', space=vmem, size = 0x9000, scoped, tag = 'internal scratch']
  #allocation2 [shape = 'f32[64,256]{1,0:T(8,128)}', space=vmem, size = 0x10000, scoped, tag = 'scratch operand']
  #allocation3 [shape = 'f32[64,256]{1,0:T(8,128)}', space=vmem, size = 0x10000, scoped, tag = 'scratch operand']
  %s0 = inlined_call_operand.hbm [shape: f32[128,256], index: 0, kind: input, shape index: {}]
  %s1 = inlined_call_operand.hbm [shape: f32[1,256], index: 1, kind: input, shape index: {}]
  %s2 = inlined_call_operand.hbm [shape: f32[1,256], index: 2, kind: input, shape index: {}]
  %s3 = inlined_call_operand.hbm [shape: f32[256,512], index: 3, kind: input, shape index: {}]
  %s4 = inlined_call_operand.hbm [shape: f32[1,512], index: 4, kind: input, shape index: {}]
  %s5 = inlined_call_operand.hbm [shape: f32[512,256], index: 5, kind: input, shape index: {}]
  %s6 = inlined_call_operand.vmem [shape: f32[1,256], index: 6, kind: input, shape index: {}]
  %s7 = inlined_call_operand.hbm [shape: f32[128,256], index: 7, kind: output, shape index: {}]
  %s8 = sld [smem:[#allocation0]]
  $region93: #{tpu_custom_call.1} parent=0
    _
  %s10 = ssub.s32 1, %s8
  %s11 = scalar_select 0, %s10, %s8
  $region1: #{tpu_custom_call.1} parent=0
    #allocation4 [shape = 'u8[131072]{0}', space=vmem, size = 0x20000, scoped, tag = 'input window, operand 0']
    #allocation5 [shape = 's32[2]{0}', space=sflag, size = 0x8, scoped, tag = 'scoped memory for tpu_custom_call.1']
    #allocation6 [shape = 's32[2]{0}', space=sflag, size = 0x8, scoped, tag = 'scoped memory for tpu_custom_call.1']
    #allocation7 [shape = 'u8[1024]{0}', space=vmem, size = 0x400, scoped, tag = 'input window, operand 1, single buffered']
    #allocation8 [shape = 's32[1]{0}', space=sflag, size = 0x4, scoped, tag = 'scoped memory for tpu_custom_call.1']
    #allocation9 [shape = 'u8[1024]{0}', space=vmem, size = 0x400, scoped, tag = 'input window, operand 2, single buffered']
    #allocation10 [shape = 'u8[262144]{0}', space=vmem, size = 0x40000, scoped, tag = 'input window, operand 3']
    #allocation11 [shape = 's32[2]{0}', space=sflag, size = 0x8, scoped, tag = 'scoped memory for tpu_custom_call.1']
    #allocation12 [shape = 'u8[1024]{0}', space=vmem, size = 0x400, scoped, tag = 'input window, operand 4']
    #allocation13 [shape = 'u8[262144]{0}', space=vmem, size = 0x40000, scoped, tag = 'input window, operand 5']
    #allocation14 [shape = 's32[2]{0}', space=sflag, size = 0x8, scoped, tag = 'scoped memory for tpu_custom_call.1']
    #allocation15 [shape = 'u8[131072]{0}', space=vmem, size = 0x20000, scoped, tag = 'output window, operand 0']
    %12 = vsyncpa [#allocation5], 0
    %s13 = scalar_lea.sflag [#allocation5], 1
    %14 = vsyncpa %s13, 0
    %15 = vsyncpa [#allocation8], 0
    %16 = vsyncpa [#allocation11], 0
    %s17 = scalar_lea.sflag [#allocation11], 1
    %18 = vsyncpa %s17, 0
    %19 = vsyncpa [#allocation14], 0
    %s20 = scalar_lea.sflag [#allocation14], 1
    %21 = vsyncpa %s20, 0
    %22 = vsyncpa [#allocation6], 0
    %s23 = scalar_lea.sflag [#allocation6], 1
    %24 = vsyncpa %s23, 0
    loop: start=0, step=1, limit=10
    $region2: #{tpu_custom_call.1} parent=1 // loop_pre_header
      _
    $region3: #{tpu_custom_call.1} parent=1 // loop_header
      %s26 = sphi 0, %s30
      %p27 = scmp.ge.s32.totalorder %s26, 10
      %s33 = sphi 0, %s45
      %s34 = sphi 0, %s41
      %s35 = sphi 0, %s33
      %s36 = sphi 0, %s34
      %s37 = sphi 0, %s35
      %s38 = sphi 0, %s36
      %s48 = sphi 0, %s50
      %s51 = sphi 0, %s48
      %s52 = sphi 0, %s51
      %s68 = sphi 0, %s52
      %s72 = sphi 0, %s72
      %s74 = sphi 0, %s72
      %s75 = sphi 0, %s74
      %s89 = sphi 0, %s75
      %s93 = sphi 0, %s93
      %s95 = sphi 0, %s93
      %s96 = sphi 0, %s95
      %s110 = sphi 0, %s96
      %s116 = sphi 0, %s118
      %s119 = sphi 0, %s116
      %s120 = sphi 0, %s119
      %s136 = sphi 0, %s120
      %s142 = sphi 0, %s144
      %s145 = sphi 0, %s142
      %s146 = sphi 0, %s145
      %s162 = sphi 0, %s146
      %s168 = sphi 0, %s170
      %s171 = sphi 0, %s168
      %s172 = sphi 0, %s171
      %s188 = sphi 0, %s172
      %s192 = sphi 0, %s192
      %s194 = sphi 0, %s192
      %s195 = sphi 0, %s194
      %s209 = sphi 0, %s195
      %s215 = sphi 0, %s217
      %s218 = sphi 0, %s215
      %s219 = sphi 0, %s218
      %s235 = sphi 0, %s219
    $region4: #{tpu_custom_call.1} parent=1 // loop_header_branch
      %29 = sbr.rel (%p27) target = $region8
    $region5: #{tpu_custom_call.1} parent=1 // loop_body
      %s31 = ssub.s32 %s26, 1
      %s32 = ssub.s32 %s26, 2
      %s39 = sadd.s32 1, %s34
      %p40 = scmp.ge.s32.totalorder %s39, 4
      %s41 = scalar_select %p40, 0, %s39
      %s42 = sadd.s32 1, %s33
      %s43 = scalar_select %p40, %s42, %s33
      %p44 = scmp.ge.s32.totalorder %s43, 2
      %s45 = scalar_select %p44, 0, %s43
      %s46 = ssub.s32 %s33, %s45
      %p47 = scmp.eq.s32.totalorder %s46, 0
      %s49 = sadd.s32 %s48, 1
      %s50 = scalar_select %p47, %s48, %s49
      %p53 = pneg %p47
      %p54 = scmp.eq.s32.totalorder %s26, 7
      %p55 = por %p53, %p54
      %p56 = scmp.ne.s32.totalorder %s48, %s51
      %p57 = scmp.eq.s32.totalorder %s26, 0
      %p58 = por %p56, %p57
      %p59 = scmp.ne.s32.totalorder %s48, %s51
      %p60 = scmp.eq.s32.totalorder %s31, 7
      %p61 = por %p59, %p60
      %p62 = scmp.ne.s32.totalorder %s51, %s52
      %p63 = scmp.eq.s32.totalorder %s31, 0
      %p64 = por %p62, %p63
      %p65 = scmp.ne.s32.totalorder %s51, %s52
      %p66 = scmp.eq.s32.totalorder %s32, 7
      %p67 = por %p65, %p66
      %p69 = scmp.ne.s32.totalorder %s52, %s68
      %p70 = scmp.eq.s32.totalorder %s32, 0
      %p71 = por %p69, %p70
      %s73 = sadd.s32 %s72, 1
      %p76 = scmp.eq.s32.totalorder %s26, 7
      %p77 = scmp.ne.s32.totalorder %s72, %s74
      %p78 = scmp.eq.s32.totalorder %s26, 0
      %p79 = por %p77, %p78
      %p80 = scmp.ne.s32.totalorder %s72, %s74
      %p81 = scmp.eq.s32.totalorder %s31, 7
      %p82 = por %p80, %p81
      %p83 = scmp.ne.s32.totalorder %s74, %s75
      %p84 = scmp.eq.s32.totalorder %s31, 0
      %p85 = por %p83, %p84
      %p86 = scmp.ne.s32.totalorder %s74, %s75
      %p87 = scmp.eq.s32.totalorder %s32, 7
      %p88 = por %p86, %p87
      %p90 = scmp.ne.s32.totalorder %s75, %s89
      %p91 = scmp.eq.s32.totalorder %s32, 0
      %p92 = por %p90, %p91
      %s94 = sadd.s32 %s93, 1
      %p97 = scmp.eq.s32.totalorder %s26, 7
      %p98 = scmp.ne.s32.totalorder %s93, %s95
      %p99 = scmp.eq.s32.totalorder %s26, 0
      %p100 = por %p98, %p99
      %p101 = scmp.ne.s32.totalorder %s93, %s95
      %p102 = scmp.eq.s32.totalorder %s31, 7
      %p103 = por %p101, %p102
      %p104 = scmp.ne.s32.totalorder %s95, %s96
      %p105 = scmp.eq.s32.totalorder %s31, 0
      %p106 = por %p104, %p105
      %p107 = scmp.ne.s32.totalorder %s95, %s96
      %p108 = scmp.eq.s32.totalorder %s32, 7
      %p109 = por %p107, %p108
      %p111 = scmp.ne.s32.totalorder %s96, %s110
      %p112 = scmp.eq.s32.totalorder %s32, 0
      %p113 = por %p111, %p112
      %s114 = ssub.s32 %s34, %s41
      %p115 = scmp.eq.s32.totalorder %s114, 0
      %s117 = sadd.s32 %s116, 1
      %s118 = scalar_select %p115, %s116, %s117
      %p121 = pneg %p115
      %p122 = scmp.eq.s32.totalorder %s26, 7
      %p123 = por %p121, %p122
      %p124 = scmp.ne.s32.totalorder %s116, %s119
      %p125 = scmp.eq.s32.totalorder %s26, 0
      %p126 = por %p124, %p125
      %p127 = scmp.ne.s32.totalorder %s116, %s119
      %p128 = scmp.eq.s32.totalorder %s31, 7
      %p129 = por %p127, %p128
      %p130 = scmp.ne.s32.totalorder %s119, %s120
      %p131 = scmp.eq.s32.totalorder %s31, 0
      %p132 = por %p130, %p131
      %p133 = scmp.ne.s32.totalorder %s119, %s120
      %p134 = scmp.eq.s32.totalorder %s32, 7
      %p135 = por %p133, %p134
      %p137 = scmp.ne.s32.totalorder %s120, %s136
      %p138 = scmp.eq.s32.totalorder %s32, 0
      %p139 = por %p137, %p138
      %s140 = ssub.s32 %s34, %s41
      %p141 = scmp.eq.s32.totalorder %s140, 0
      %s143 = sadd.s32 %s142, 1
      %s144 = scalar_select %p141, %s142, %s143
      %p147 = pneg %p141
      %p148 = scmp.eq.s32.totalorder %s26, 7
      %p149 = por %p147, %p148
      %p150 = scmp.ne.s32.totalorder %s142, %s145
      %p151 = scmp.eq.s32.totalorder %s26, 0
      %p152 = por %p150, %p151
      %p153 = scmp.ne.s32.totalorder %s142, %s145
      %p154 = scmp.eq.s32.totalorder %s31, 7
      %p155 = por %p153, %p154
      %p156 = scmp.ne.s32.totalorder %s145, %s146
      %p157 = scmp.eq.s32.totalorder %s31, 0
      %p158 = por %p156, %p157
      %p159 = scmp.ne.s32.totalorder %s145, %s146
      %p160 = scmp.eq.s32.totalorder %s32, 7
      %p161 = por %p159, %p160
      %p163 = scmp.ne.s32.totalorder %s146, %s162
      %p164 = scmp.eq.s32.totalorder %s32, 0
      %p165 = por %p163, %p164
      %s166 = ssub.s32 %s34, %s41
      %p167 = scmp.eq.s32.totalorder %s166, 0
      %s169 = sadd.s32 %s168, 1
      %s170 = scalar_select %p167, %s168, %s169
      %p173 = pneg %p167
      %p174 = scmp.eq.s32.totalorder %s26, 7
      %p175 = por %p173, %p174
      %p176 = scmp.ne.s32.totalorder %s168, %s171
      %p177 = scmp.eq.s32.totalorder %s26, 0
      %p178 = por %p176, %p177
      %p179 = scmp.ne.s32.totalorder %s168, %s171
      %p180 = scmp.eq.s32.totalorder %s31, 7
      %p181 = por %p179, %p180
      %p182 = scmp.ne.s32.totalorder %s171, %s172
      %p183 = scmp.eq.s32.totalorder %s31, 0
      %p184 = por %p182, %p183
      %p185 = scmp.ne.s32.totalorder %s171, %s172
      %p186 = scmp.eq.s32.totalorder %s32, 7
      %p187 = por %p185, %p186
      %p189 = scmp.ne.s32.totalorder %s172, %s188
      %p190 = scmp.eq.s32.totalorder %s32, 0
      %p191 = por %p189, %p190
      %s193 = sadd.s32 %s192, 1
      %p196 = scmp.eq.s32.totalorder %s26, 7
      %p197 = scmp.ne.s32.totalorder %s192, %s194
      %p198 = scmp.eq.s32.totalorder %s26, 0
      %p199 = por %p197, %p198
      %p200 = scmp.ne.s32.totalorder %s192, %s194
      %p201 = scmp.eq.s32.totalorder %s31, 7
      %p202 = por %p200, %p201
      %p203 = scmp.ne.s32.totalorder %s194, %s195
      %p204 = scmp.eq.s32.totalorder %s31, 0
      %p205 = por %p203, %p204
      %p206 = scmp.ne.s32.totalorder %s194, %s195
      %p207 = scmp.eq.s32.totalorder %s32, 7
      %p208 = por %p206, %p207
      %p210 = scmp.ne.s32.totalorder %s195, %s209
      %p211 = scmp.eq.s32.totalorder %s32, 0
      %p212 = por %p210, %p211
      %s213 = ssub.s32 %s33, %s45
      %p214 = scmp.eq.s32.totalorder %s213, 0
      %s216 = sadd.s32 %s215, 1
      %s217 = scalar_select %p214, %s215, %s216
      %p220 = pneg %p214
      %p221 = scmp.eq.s32.totalorder %s26, 7
      %p222 = por %p220, %p221
      %p223 = scmp.ne.s32.totalorder %s215, %s218
      %p224 = scmp.eq.s32.totalorder %s26, 0
      %p225 = por %p223, %p224
      %p226 = scmp.ne.s32.totalorder %s215, %s218
      %p227 = scmp.eq.s32.totalorder %s31, 7
      %p228 = por %p226, %p227
      %p229 = scmp.ne.s32.totalorder %s218, %s219
      %p230 = scmp.eq.s32.totalorder %s31, 0
      %p231 = por %p229, %p230
      %p232 = scmp.ne.s32.totalorder %s218, %s219
      %p233 = scmp.eq.s32.totalorder %s32, 7
      %p234 = por %p232, %p233
      %p236 = scmp.ne.s32.totalorder %s219, %s235
      %p237 = scmp.eq.s32.totalorder %s32, 0
      %p238 = por %p236, %p237
      %p239 = scmp.le.s32.totalorder 1, %s26
      %p240 = scmp.lt.s32.totalorder %s26, 9
      %p241 = pnand %p239, %p240
      %p242 = pneg %p241
      // Predicated region
      $region9: #{tpu_custom_call.1} parent=5 // pred_check
        _
      $region10: #{tpu_custom_call.1} parent=5 // pred_check_branch
        %244 = sbr.rel (%p241) target = $region12
      $region11: #{tpu_custom_call.1} parent=5 // pred_region
        %s245 = ssub.s32 %s26, 1
        // Predicated region
        $region13: #{tpu_custom_call.1} parent=11 // pred_check
          %p246 = pneg %p85
        $region14: #{tpu_custom_call.1} parent=11 // pred_check_branch
          %248 = sbr.rel (%p246) target = $region16
        $region15: #{tpu_custom_call.1} parent=11 // pred_region
          %250 = vsyncadd [#allocation8], 0
          %s252 = sshll.u32 %s1, 4
          %s253 = int_to_ptr.hbm [resolvable:$true] %s252
          %s254 = sshll.u32 [#allocation7], 4
          %s255 = int_to_ptr.vmem [resolvable:$true] %s254
          %257 = dma.hbm_to_vmem [thread:$0]  %s253, 32, %s255, [#allocation8]
        $region16: #{tpu_custom_call.1} parent=11 // pred_fallthru
          _
        // Predicated region
        $region17: #{tpu_custom_call.1} parent=11 // pred_check
          %p258 = pneg %p106
        $region18: #{tpu_custom_call.1} parent=11 // pred_check_branch
          %260 = sbr.rel (%p258) target = $region20
        $region19: #{tpu_custom_call.1} parent=11 // pred_region
          %262 = vsyncadd [#allocation8], 0
          %s264 = sshll.u32 %s2, 4
          %s265 = int_to_ptr.hbm [resolvable:$true] %s264
          %s266 = sshll.u32 [#allocation9], 4
          %s267 = int_to_ptr.vmem [resolvable:$true] %s266
          %269 = dma.hbm_to_vmem [thread:$0]  %s265, 32, %s267, [#allocation8]
        $region20: #{tpu_custom_call.1} parent=11 // pred_fallthru
          _
        // Predicated region
        $region21: #{tpu_custom_call.1} parent=11 // pred_check
          %p270 = pneg %p205
        $region22: #{tpu_custom_call.1} parent=11 // pred_check_branch
          %272 = sbr.rel (%p270) target = $region24
        $region23: #{tpu_custom_call.1} parent=11 // pred_region
          _
        $region24: #{tpu_custom_call.1} parent=11 // pred_fallthru
          _
      $region12: #{tpu_custom_call.1} parent=5 // pred_fallthru
        _
      %p273 = scmp.lt.s32.totalorder %s26, 8
      // Predicated region
      $region25: #{tpu_custom_call.1} parent=5 // pred_check
        %p274 = pneg %p273
      $region26: #{tpu_custom_call.1} parent=5 // pred_check_branch
        %276 = sbr.rel (%p274) target = $region28
      $region27: #{tpu_custom_call.1} parent=5 // pred_region
        // Predicated region
        $region29: #{tpu_custom_call.1} parent=27 // pred_check
          %p277 = pneg %p58
        $region30: #{tpu_custom_call.1} parent=27 // pred_check_branch
          %279 = sbr.rel (%p277) target = $region32
        $region31: #{tpu_custom_call.1} parent=27 // pred_region
          %s280 = sand.u32 %s48, 1
          %s281 = scalar_lea.sflag [#allocation5], %s280
          %s282 = sand.u32 %s48, 1
          %s283 = smul.addr %s282, 128
          %s284 = scalar_lea.vmem [#allocation4], %s283
          %s285 = smul.u32 8, %s33
          %287 = vsyncadd %s281, 0
          %s288 = smul.addr %s285, 2
          %s289 = smul.addr %s288, 8
          %s290 = scalar_lea.hbm %s0, %s289
          %s291 = sshll.u32 %s290, 4
          %s292 = int_to_ptr.hbm [resolvable:$true] %s291
          %s293 = sshll.u32 %s284, 4
          %s294 = int_to_ptr.vmem [resolvable:$true] %s293
          %299 = dma.hbm_to_vmem [thread:$0]  %s292, 2048, %s294, %s281, 256, 256, 16
        $region32: #{tpu_custom_call.1} parent=27 // pred_fallthru
          _
        // Predicated region
        $region33: #{tpu_custom_call.1} parent=27 // pred_check
          %p300 = pneg %p126
        $region34: #{tpu_custom_call.1} parent=27 // pred_check_branch
          %302 = sbr.rel (%p300) target = $region36
        $region35: #{tpu_custom_call.1} parent=27 // pred_region
          %s303 = sand.u32 %s26, 1
          %s304 = scalar_lea.sflag [#allocation11], %s303
          %s305 = sand.u32 %s116, 1
          %s306 = smul.addr %s305, 256
          %s307 = scalar_lea.vmem [#allocation10], %s306
          %309 = vsyncadd %s304, 0
          %s310 = smul.addr %s34, 8
          %s311 = scalar_lea.hbm %s3, %s310
          %s312 = sshll.u32 %s311, 4
          %s313 = int_to_ptr.hbm [resolvable:$true] %s312
          %s314 = sshll.u32 %s307, 4
          %s315 = int_to_ptr.vmem [resolvable:$true] %s314
          %320 = dma.hbm_to_vmem [thread:$0]  %s313, 4096, %s315, %s304, 512, 128, 8
        $region36: #{tpu_custom_call.1} parent=27 // pred_fallthru
          _
        // Predicated region
        $region37: #{tpu_custom_call.1} parent=27 // pred_check
          %p321 = pneg %p152
        $region38: #{tpu_custom_call.1} parent=27 // pred_check_branch
          %323 = sbr.rel (%p321) target = $region40
        $region39: #{tpu_custom_call.1} parent=27 // pred_region
          %s324 = sand.u32 %s26, 1
          %s325 = scalar_lea.sflag [#allocation11], %s324
          %s326 = sand.u32 %s142, 1
          %s327 = scalar_lea.vmem [#allocation12], %s326
          %329 = vsyncadd %s325, 0
          %s330 = scalar_lea.hbm %s4, %s34
          %s332 = sshll.u32 %s330, 4
          %s333 = int_to_ptr.hbm [resolvable:$true] %s332
          %s334 = sshll.u32 %s327, 4
          %s335 = int_to_ptr.vmem [resolvable:$true] %s334
          %337 = dma.hbm_to_vmem [thread:$0]  %s333, 16, %s335, %s325
        $region40: #{tpu_custom_call.1} parent=27 // pred_fallthru
          _
        // Predicated region
        $region41: #{tpu_custom_call.1} parent=27 // pred_check
          %p338 = pneg %p178
        $region42: #{tpu_custom_call.1} parent=27 // pred_check_branch
          %340 = sbr.rel (%p338) target = $region44
        $region43: #{tpu_custom_call.1} parent=27 // pred_region
          %s341 = sand.u32 %s168, 1
          %s342 = scalar_lea.sflag [#allocation14], %s341
          %s343 = sand.u32 %s168, 1
          %s344 = smul.addr %s343, 256
          %s345 = scalar_lea.vmem [#allocation13], %s344
          %s346 = smul.u32 16, %s34
          %348 = vsyncadd %s342, 0
          %s349 = smul.addr %s346, 2
          %s350 = smul.addr %s349, 8
          %s351 = scalar_lea.hbm %s5, %s350
          %s352 = sshll.u32 %s351, 4
          %s353 = int_to_ptr.hbm [resolvable:$true] %s352
          %s354 = sshll.u32 %s345, 4
          %s355 = int_to_ptr.vmem [resolvable:$true] %s354
          %360 = dma.hbm_to_vmem [thread:$0]  %s353, 4096, %s355, %s342, 256, 256, 16
        $region44: #{tpu_custom_call.1} parent=27 // pred_fallthru
          _
      $region28: #{tpu_custom_call.1} parent=5 // pred_fallthru
        _
      %p361 = scmp.le.s32.totalorder 1, %s26
      %p362 = scmp.lt.s32.totalorder %s26, 9
      %p363 = pnand %p361, %p362
      %p364 = pneg %p363
      // Predicated region
      $region45: #{tpu_custom_call.1} parent=5 // pred_check
        _
      $region46: #{tpu_custom_call.1} parent=5 // pred_check_branch
        %366 = sbr.rel (%p363) target = $region48
      $region47: #{tpu_custom_call.1} parent=5 // pred_region
        %s367 = ssub.s32 %s26, 1
        %s368 = sand.u32 %s51, 1
        %s369 = scalar_lea.sflag [#allocation5], %s368
        %s370 = sand.u32 %s51, 1
        %s371 = smul.addr %s370, 128
        %s372 = scalar_lea.vmem [#allocation4], %s371
        // Predicated region
        $region49: #{tpu_custom_call.1} parent=47 // pred_check
          %p373 = pneg %p64
        $region50: #{tpu_custom_call.1} parent=47 // pred_check_branch
          %375 = sbr.rel (%p373) target = $region52
        $region51: #{tpu_custom_call.1} parent=47 // pred_region
          %377 = dma.done %s369, 2048
        $region52: #{tpu_custom_call.1} parent=47 // pred_fallthru
          _
        // Predicated region
        $region53: #{tpu_custom_call.1} parent=47 // pred_check
          %p378 = pneg %p85
        $region54: #{tpu_custom_call.1} parent=47 // pred_check_branch
          %380 = sbr.rel (%p378) target = $region56
        $region55: #{tpu_custom_call.1} parent=47 // pred_region
          %382 = dma.done [#allocation8], 32
        $region56: #{tpu_custom_call.1} parent=47 // pred_fallthru
          _
        // Predicated region
        $region57: #{tpu_custom_call.1} parent=47 // pred_check
          %p383 = pneg %p106
        $region58: #{tpu_custom_call.1} parent=47 // pred_check_branch
          %385 = sbr.rel (%p383) target = $region60
        $region59: #{tpu_custom_call.1} parent=47 // pred_region
          %387 = dma.done [#allocation8], 32
        $region60: #{tpu_custom_call.1} parent=47 // pred_fallthru
          _
        %s388 = sand.u32 %s31, 1
        %s389 = scalar_lea.sflag [#allocation11], %s388
        %s390 = sand.u32 %s119, 1
        %s391 = smul.addr %s390, 256
        %s392 = scalar_lea.vmem [#allocation10], %s391
        // Predicated region
        $region61: #{tpu_custom_call.1} parent=47 // pred_check
          %p393 = pneg %p132
        $region62: #{tpu_custom_call.1} parent=47 // pred_check_branch
          %395 = sbr.rel (%p393) target = $region64
        $region63: #{tpu_custom_call.1} parent=47 // pred_region
          %397 = dma.done %s389, 4096
        $region64: #{tpu_custom_call.1} parent=47 // pred_fallthru
          _
        %s398 = sand.u32 %s31, 1
        %s399 = scalar_lea.sflag [#allocation11], %s398
        %s400 = sand.u32 %s145, 1
        %s401 = scalar_lea.vmem [#allocation12], %s400
        // Predicated region
        $region65: #{tpu_custom_call.1} parent=47 // pred_check
          %p402 = pneg %p158
        $region66: #{tpu_custom_call.1} parent=47 // pred_check_branch
          %404 = sbr.rel (%p402) target = $region68
        $region67: #{tpu_custom_call.1} parent=47 // pred_region
          %406 = dma.done %s399, 16
        $region68: #{tpu_custom_call.1} parent=47 // pred_fallthru
          _
        %s407 = sand.u32 %s171, 1
        %s408 = scalar_lea.sflag [#allocation14], %s407
        %s409 = sand.u32 %s171, 1
        %s410 = smul.addr %s409, 256
        %s411 = scalar_lea.vmem [#allocation13], %s410
        // Predicated region
        $region69: #{tpu_custom_call.1} parent=47 // pred_check
          %p412 = pneg %p184
        $region70: #{tpu_custom_call.1} parent=47 // pred_check_branch
          %414 = sbr.rel (%p412) target = $region72
        $region71: #{tpu_custom_call.1} parent=47 // pred_region
          %416 = dma.done %s408, 4096
        $region72: #{tpu_custom_call.1} parent=47 // pred_fallthru
          _
        %s417 = sand.u32 %s51, 1
        %s418 = scalar_lea.sflag [#allocation5], %s417
        %s419 = sand.u32 %s51, 1
        %s420 = smul.addr %s419, 128
        %s421 = scalar_lea.vmem [#allocation4], %s420
        %p422 = pneg %p64
        %p423 = pneg %p61
        %p424 = pneg %p85
        %p425 = pneg %p82
        %p426 = pneg %p106
        %p427 = pneg %p103
        %s428 = sand.u32 %s31, 1
        %s429 = scalar_lea.sflag [#allocation11], %s428
        %s430 = sand.u32 %s119, 1
        %s431 = smul.addr %s430, 256
        %s432 = scalar_lea.vmem [#allocation10], %s431
        %p433 = pneg %p132
        %p434 = pneg %p129
        %s435 = sand.u32 %s31, 1
        %s436 = scalar_lea.sflag [#allocation11], %s435
        %s437 = sand.u32 %s145, 1
        %s438 = scalar_lea.vmem [#allocation12], %s437
        %p439 = pneg %p158
        %p440 = pneg %p155
        %s441 = sand.u32 %s171, 1
        %s442 = scalar_lea.sflag [#allocation14], %s441
        %s443 = sand.u32 %s171, 1
        %s444 = smul.addr %s443, 256
        %s445 = scalar_lea.vmem [#allocation13], %s444
        %p446 = pneg %p184
        %p447 = pneg %p181
        %p448 = pneg %p205
        %p449 = pneg %p202
        %p450 = pneg %p231
        %p451 = pneg %p228
        %s452 = sand.u32 %s218, 1
        %s453 = scalar_lea.sflag [#allocation6], %s452
        %s454 = sand.u32 %s218, 1
        %s455 = smul.addr %s454, 128
        %s456 = scalar_lea.vmem [#allocation15], %s455
        %s457 = smul.u32 8, %s35
        %s458 = smul.u32 16, %s36
        %s459 = smul.u32 8, %s35
        %p460 = scmp.eq.s32.totalorder %s36, 0
        // Predicated region
        $region73: #{tpu_custom_call.1} parent=47 // pred_check
          %p461 = pneg %p460
        $region74: #{tpu_custom_call.1} parent=47 // pred_check_branch
          %463 = sbr.rel (%p461) target = $region76
        $region75: #{tpu_custom_call.1} parent=47 // pred_region
          %v464 = vld [vmem:[%s372] sm:$0xff]
          %v465 = vld [vmem:[%s372 + $0x8] sm:$0xff]
          %v466 = vld [vmem:[%s372 + $0x10] sm:$0xff]
          %v467 = vld [vmem:[%s372 + $0x18] sm:$0xff]
          %v468 = vld [vmem:[%s372 + $0x20] sm:$0xff]
          %v469 = vld [vmem:[%s372 + $0x28] sm:$0xff]
          %v470 = vld [vmem:[%s372 + $0x30] sm:$0xff]
          %v471 = vld [vmem:[%s372 + $0x38] sm:$0xff]
          %v472 = vld [vmem:[%s372 + $0x40] sm:$0xff]
          %v473 = vld [vmem:[%s372 + $0x48] sm:$0xff]
          %v474 = vld [vmem:[%s372 + $0x50] sm:$0xff]
          %v475 = vld [vmem:[%s372 + $0x58] sm:$0xff]
          %v476 = vld [vmem:[%s372 + $0x60] sm:$0xff]
          %v477 = vld [vmem:[%s372 + $0x68] sm:$0xff]
          %v478 = vld [vmem:[%s372 + $0x70] sm:$0xff]
          %v479 = vld [vmem:[%s372 + $0x78] sm:$0xff]
          %v480 = vadd.f32 %v464, %v465
          %481 = vadd.xlane.f32.xlu0 %v480
          %v482 = vpop.xlane.xlu0 %481
          %v483 = vadd.f32 %v466, %v467
          %484 = vadd.xlane.f32.xlu0 %v483
          %v485 = vpop.xlane.xlu0 %484
          %v486 = vadd.f32 %v468, %v469
          %487 = vadd.xlane.f32.xlu0 %v486
          %v488 = vpop.xlane.xlu0 %487
          %v489 = vadd.f32 %v470, %v471
          %490 = vadd.xlane.f32.xlu0 %v489
          %v491 = vpop.xlane.xlu0 %490
          %v492 = vadd.f32 %v472, %v473
          %493 = vadd.xlane.f32.xlu0 %v492
          %v494 = vpop.xlane.xlu0 %493
          %v495 = vadd.f32 %v474, %v475
          %496 = vadd.xlane.f32.xlu0 %v495
          %v497 = vpop.xlane.xlu0 %496
          %v498 = vadd.f32 %v476, %v477
          %499 = vadd.xlane.f32.xlu0 %v498
          %v500 = vpop.xlane.xlu0 %499
          %v501 = vadd.f32 %v478, %v479
          %502 = vadd.xlane.f32.xlu0 %v501
          %v503 = vpop.xlane.xlu0 %502
          %v504 = vrcp.pop 256.0
          %v505 = vmul.f32 256.0, %v504
          %v506 = vsub.f32 1.0, %v505
          %v507 = vmul.f32 %v504, %v506
          %v508 = vadd.f32 %v504, %v507
          %vm509 = vweird.f32 %v504
          %v510 = vsel %vm509, %v504, %v508
          %v511 = vmul.f32 %v482, %v510
          %v512 = vmul.f32 %v485, %v510
          %v513 = vmul.f32 %v488, %v510
          %v514 = vmul.f32 %v491, %v510
          %v515 = vmul.f32 %v494, %v510
          %v516 = vmul.f32 %v497, %v510
          %v517 = vmul.f32 %v500, %v510
          %v518 = vmul.f32 %v503, %v510
          %v519 = vsub.f32 %v464, %v511
          %v520 = vsub.f32 %v465, %v511
          %v521 = vsub.f32 %v466, %v512
          %v522 = vsub.f32 %v467, %v512
          %v523 = vsub.f32 %v468, %v513
          %v524 = vsub.f32 %v469, %v513
          %v525 = vsub.f32 %v470, %v514
          %v526 = vsub.f32 %v471, %v514
          %v527 = vsub.f32 %v472, %v515
          %v528 = vsub.f32 %v473, %v515
          %v529 = vsub.f32 %v474, %v516
          %v530 = vsub.f32 %v475, %v516
          %v531 = vsub.f32 %v476, %v517
          %v532 = vsub.f32 %v477, %v517
          %v533 = vsub.f32 %v478, %v518
          %v534 = vsub.f32 %v479, %v518
          %v535 = vmul.f32 %v519, %v519
          %v536 = vmul.f32 %v520, %v520
          %v537 = vmul.f32 %v521, %v521
          %v538 = vmul.f32 %v522, %v522
          %v539 = vmul.f32 %v523, %v523
          %v540 = vmul.f32 %v524, %v524
          %v541 = vmul.f32 %v525, %v525
          %v542 = vmul.f32 %v526, %v526
          %v543 = vmul.f32 %v527, %v527
          %v544 = vmul.f32 %v528, %v528
          %v545 = vmul.f32 %v529, %v529
          %v546 = vmul.f32 %v530, %v530
          %v547 = vmul.f32 %v531, %v531
          %v548 = vmul.f32 %v532, %v532
          %v549 = vmul.f32 %v533, %v533
          %v550 = vmul.f32 %v534, %v534
          %v551 = vadd.f32 %v535, %v536
          %552 = vadd.xlane.f32.xlu0 %v551
          %v553 = vpop.xlane.xlu0 %552
          %v554 = vadd.f32 %v537, %v538
          %555 = vadd.xlane.f32.xlu0 %v554
          %v556 = vpop.xlane.xlu0 %555
          %v557 = vadd.f32 %v539, %v540
          %558 = vadd.xlane.f32.xlu0 %v557
          %v559 = vpop.xlane.xlu0 %558
          %v560 = vadd.f32 %v541, %v542
          %561 = vadd.xlane.f32.xlu0 %v560
          %v562 = vpop.xlane.xlu0 %561
          %v563 = vadd.f32 %v543, %v544
          %564 = vadd.xlane.f32.xlu0 %v563
          %v565 = vpop.xlane.xlu0 %564
          %v566 = vadd.f32 %v545, %v546
          %567 = vadd.xlane.f32.xlu0 %v566
          %v568 = vpop.xlane.xlu0 %567
          %v569 = vadd.f32 %v547, %v548
          %570 = vadd.xlane.f32.xlu0 %v569
          %v571 = vpop.xlane.xlu0 %570
          %v572 = vadd.f32 %v549, %v550
          %573 = vadd.xlane.f32.xlu0 %v572
          %v574 = vpop.xlane.xlu0 %573
          %v575 = vmul.f32 %v553, %v510
          %v576 = vmul.f32 %v556, %v510
          %v577 = vmul.f32 %v559, %v510
          %v578 = vmul.f32 %v562, %v510
          %v579 = vmul.f32 %v565, %v510
          %v580 = vmul.f32 %v568, %v510
          %v581 = vmul.f32 %v571, %v510
          %v582 = vmul.f32 %v574, %v510
          %v583 = vadd.f32 %v575, 1e-05
          %v584 = vadd.f32 %v576, 1e-05
          %v585 = vadd.f32 %v577, 1e-05
          %v586 = vadd.f32 %v578, 1e-05
          %v587 = vadd.f32 %v579, 1e-05
          %v588 = vadd.f32 %v580, 1e-05
          %v589 = vadd.f32 %v581, 1e-05
          %v590 = vadd.f32 %v582, 1e-05
          %v591 = vrsqrt.pop %v583
          %v592 = vmul.f32 %v591, %v583
          %v593 = vmul.f32 %v592, %v591
          %v594 = vmul.f32 0.5, %v593
          %v595 = vsub.f32 1.5, %v594
          %v596 = vmul.f32 %v591, %v595
          %vm597 = vweird.f32 %v583
          %vm598 = vweird.f32 %v591
          %vm599 = vmor %vm597, %vm598
          %v600 = vsel %vm599, %v591, %v596
          %v601 = vrsqrt.pop %v584
          %v602 = vmul.f32 %v601, %v584
          %v603 = vmul.f32 %v602, %v601
          %v604 = vmul.f32 0.5, %v603
          %v605 = vsub.f32 1.5, %v604
          %v606 = vmul.f32 %v601, %v605
          %vm607 = vweird.f32 %v584
          %vm608 = vweird.f32 %v601
          %vm609 = vmor %vm607, %vm608
          %v610 = vsel %vm609, %v601, %v606
          %v611 = vrsqrt.pop %v585
          %v612 = vmul.f32 %v611, %v585
          %v613 = vmul.f32 %v612, %v611
          %v614 = vmul.f32 0.5, %v613
          %v615 = vsub.f32 1.5, %v614
          %v616 = vmul.f32 %v611, %v615
          %vm617 = vweird.f32 %v585
          %vm618 = vweird.f32 %v611
          %vm619 = vmor %vm617, %vm618
          %v620 = vsel %vm619, %v611, %v616
          %v621 = vrsqrt.pop %v586
          %v622 = vmul.f32 %v621, %v586
          %v623 = vmul.f32 %v622, %v621
          %v624 = vmul.f32 0.5, %v623
          %v625 = vsub.f32 1.5, %v624
          %v626 = vmul.f32 %v621, %v625
          %vm627 = vweird.f32 %v586
          %vm628 = vweird.f32 %v621
          %vm629 = vmor %vm627, %vm628
          %v630 = vsel %vm629, %v621, %v626
          %v631 = vrsqrt.pop %v587
          %v632 = vmul.f32 %v631, %v587
          %v633 = vmul.f32 %v632, %v631
          %v634 = vmul.f32 0.5, %v633
          %v635 = vsub.f32 1.5, %v634
          %v636 = vmul.f32 %v631, %v635
          %vm637 = vweird.f32 %v587
          %vm638 = vweird.f32 %v631
          %vm639 = vmor %vm637, %vm638
          %v640 = vsel %vm639, %v631, %v636
          %v641 = vrsqrt.pop %v588
          %v642 = vmul.f32 %v641, %v588
          %v643 = vmul.f32 %v642, %v641
          %v644 = vmul.f32 0.5, %v643
          %v645 = vsub.f32 1.5, %v644
          %v646 = vmul.f32 %v641, %v645
          %vm647 = vweird.f32 %v588
          %vm648 = vweird.f32 %v641
          %vm649 = vmor %vm647, %vm648
          %v650 = vsel %vm649, %v641, %v646
          %v651 = vrsqrt.pop %v589
          %v652 = vmul.f32 %v651, %v589
          %v653 = vmul.f32 %v652, %v651
          %v654 = vmul.f32 0.5, %v653
          %v655 = vsub.f32 1.5, %v654
          %v656 = vmul.f32 %v651, %v655
          %vm657 = vweird.f32 %v589
          %vm658 = vweird.f32 %v651
          %vm659 = vmor %vm657, %vm658
          %v660 = vsel %vm659, %v651, %v656
          %v661 = vrsqrt.pop %v590
          %v662 = vmul.f32 %v661, %v590
          %v663 = vmul.f32 %v662, %v661
          %v664 = vmul.f32 0.5, %v663
          %v665 = vsub.f32 1.5, %v664
          %v666 = vmul.f32 %v661, %v665
          %vm667 = vweird.f32 %v590
          %vm668 = vweird.f32 %v661
          %vm669 = vmor %vm667, %vm668
          %v670 = vsel %vm669, %v661, %v666
          %v671 = vmul.f32 %v519, %v600
          %v672 = vmul.f32 %v520, %v600
          %v673 = vmul.f32 %v521, %v610
          %v674 = vmul.f32 %v522, %v610
          %v675 = vmul.f32 %v523, %v620
          %v676 = vmul.f32 %v524, %v620
          %v677 = vmul.f32 %v525, %v630
          %v678 = vmul.f32 %v526, %v630
          %v679 = vmul.f32 %v527, %v640
          %v680 = vmul.f32 %v528, %v640
          %v681 = vmul.f32 %v529, %v650
          %v682 = vmul.f32 %v530, %v650
          %v683 = vmul.f32 %v531, %v660
          %v684 = vmul.f32 %v532, %v660
          %v685 = vmul.f32 %v533, %v670
          %v686 = vmul.f32 %v534, %v670
          %v687 = vld [vmem:[#allocation7] sm:$0x3]
          %v689 = vperm.slane %v687, 0
          %v690 = vperm.slane %v687, 1
          %v693 = vmul.f32 %v671, %v689
          %v694 = vmul.f32 %v672, %v690
          %v695 = vmul.f32 %v673, %v689
          %v696 = vmul.f32 %v674, %v690
          %v697 = vmul.f32 %v675, %v689
          %v698 = vmul.f32 %v676, %v690
          %v699 = vmul.f32 %v677, %v689
          %v700 = vmul.f32 %v678, %v690
          %v701 = vmul.f32 %v679, %v689
          %v702 = vmul.f32 %v680, %v690
          %v703 = vmul.f32 %v681, %v689
          %v704 = vmul.f32 %v682, %v690
          %v705 = vmul.f32 %v683, %v689
          %v706 = vmul.f32 %v684, %v690
          %v707 = vmul.f32 %v685, %v689
          %v708 = vmul.f32 %v686, %v690
          %v709 = vld [vmem:[#allocation9] sm:$0x3]
          %v711 = vperm.slane %v709, 0
          %v712 = vperm.slane %v709, 1
          %v715 = vadd.f32 %v693, %v711
          %v716 = vadd.f32 %v694, %v712
          %v717 = vadd.f32 %v695, %v711
          %v718 = vadd.f32 %v696, %v712
          %v719 = vadd.f32 %v697, %v711
          %v720 = vadd.f32 %v698, %v712
          %v721 = vadd.f32 %v699, %v711
          %v722 = vadd.f32 %v700, %v712
          %v723 = vadd.f32 %v701, %v711
          %v724 = vadd.f32 %v702, %v712
          %v725 = vadd.f32 %v703, %v711
          %v726 = vadd.f32 %v704, %v712
          %v727 = vadd.f32 %v705, %v711
          %v728 = vadd.f32 %v706, %v712
          %v729 = vadd.f32 %v707, %v711
          %v730 = vadd.f32 %v708, %v712
          %731 = vst [vmem:[#allocation2] sm:$0xff] %v715
          %732 = vst [vmem:[#allocation2 + $0x8] sm:$0xff] %v716
          %733 = vst [vmem:[#allocation2 + $0x10] sm:$0xff] %v717
          %734 = vst [vmem:[#allocation2 + $0x18] sm:$0xff] %v718
          %735 = vst [vmem:[#allocation2 + $0x20] sm:$0xff] %v719
          %736 = vst [vmem:[#allocation2 + $0x28] sm:$0xff] %v720
          %737 = vst [vmem:[#allocation2 + $0x30] sm:$0xff] %v721
          %738 = vst [vmem:[#allocation2 + $0x38] sm:$0xff] %v722
          %739 = vst [vmem:[#allocation2 + $0x40] sm:$0xff] %v723
          %740 = vst [vmem:[#allocation2 + $0x48] sm:$0xff] %v724
          %741 = vst [vmem:[#allocation2 + $0x50] sm:$0xff] %v725
          %742 = vst [vmem:[#allocation2 + $0x58] sm:$0xff] %v726
          %743 = vst [vmem:[#allocation2 + $0x60] sm:$0xff] %v727
          %744 = vst [vmem:[#allocation2 + $0x68] sm:$0xff] %v728
          %745 = vst [vmem:[#allocation2 + $0x70] sm:$0xff] %v729
          %746 = vst [vmem:[#allocation2 + $0x78] sm:$0xff] %v730
          %747 = vst [vmem:[#allocation3] sm:$0xff] 0.0
          %748 = vst [vmem:[#allocation3 + $0x8] sm:$0xff] 0.0
          %749 = vst [vmem:[#allocation3 + $0x10] sm:$0xff] 0.0
          %750 = vst [vmem:[#allocation3 + $0x18] sm:$0xff] 0.0
          %751 = vst [vmem:[#allocation3 + $0x20] sm:$0xff] 0.0
          %752 = vst [vmem:[#allocation3 + $0x28] sm:$0xff] 0.0
          %753 = vst [vmem:[#allocation3 + $0x30] sm:$0xff] 0.0
          %754 = vst [vmem:[#allocation3 + $0x38] sm:$0xff] 0.0
          %755 = vst [vmem:[#allocation3 + $0x40] sm:$0xff] 0.0
          %756 = vst [vmem:[#allocation3 + $0x48] sm:$0xff] 0.0
          %757 = vst [vmem:[#allocation3 + $0x50] sm:$0xff] 0.0
          %758 = vst [vmem:[#allocation3 + $0x58] sm:$0xff] 0.0
          %759 = vst [vmem:[#allocation3 + $0x60] sm:$0xff] 0.0
          %760 = vst [vmem:[#allocation3 + $0x68] sm:$0xff] 0.0
          %761 = vst [vmem:[#allocation3 + $0x70] sm:$0xff] 0.0
          %762 = vst [vmem:[#allocation3 + $0x78] sm:$0xff] 0.0
        $region76: #{tpu_custom_call.1} parent=47 // pred_fallthru
          _
        %v763 = vld [vmem:[#allocation2] sm:$0xff]
        %v764 = vld [vmem:[#allocation2 + $0x8] sm:$0xff]
        %v765 = vld [vmem:[#allocation2 + $0x10] sm:$0xff]
        %v766 = vld [vmem:[#allocation2 + $0x18] sm:$0xff]
        %v767 = vld [vmem:[#allocation2 + $0x20] sm:$0xff]
        %v768 = vld [vmem:[#allocation2 + $0x28] sm:$0xff]
        %v769 = vld [vmem:[#allocation2 + $0x30] sm:$0xff]
        %v770 = vld [vmem:[#allocation2 + $0x38] sm:$0xff]
        %v771 = vld [vmem:[#allocation2 + $0x40] sm:$0xff]
        %v772 = vld [vmem:[#allocation2 + $0x48] sm:$0xff]
        %v773 = vld [vmem:[#allocation2 + $0x50] sm:$0xff]
        %v774 = vld [vmem:[#allocation2 + $0x58] sm:$0xff]
        %v775 = vld [vmem:[#allocation2 + $0x60] sm:$0xff]
        %v776 = vld [vmem:[#allocation2 + $0x68] sm:$0xff]
        %v777 = vld [vmem:[#allocation2 + $0x70] sm:$0xff]
        %v778 = vld [vmem:[#allocation2 + $0x78] sm:$0xff]
        %v779 = vld [vmem:[%s392] sm:$0xff]
        %v780 = vld [vmem:[%s392 + $0x8] sm:$0xff]
        %v781 = vld [vmem:[%s392 + $0x10] sm:$0xff]
        %v782 = vld [vmem:[%s392 + $0x18] sm:$0xff]
        %v783 = vld [vmem:[%s392 + $0x20] sm:$0xff]
        %v784 = vld [vmem:[%s392 + $0x28] sm:$0xff]
        %v785 = vld [vmem:[%s392 + $0x30] sm:$0xff]
        %v786 = vld [vmem:[%s392 + $0x38] sm:$0xff]
        %v787 = vld [vmem:[%s392 + $0x40] sm:$0xff]
        %v788 = vld [vmem:[%s392 + $0x48] sm:$0xff]
        %v789 = vld [vmem:[%s392 + $0x50] sm:$0xff]
        %v790 = vld [vmem:[%s392 + $0x58] sm:$0xff]
        %v791 = vld [vmem:[%s392 + $0x60] sm:$0xff]
        %v792 = vld [vmem:[%s392 + $0x68] sm:$0xff]
        %v793 = vld [vmem:[%s392 + $0x70] sm:$0xff]
        %v794 = vld [vmem:[%s392 + $0x78] sm:$0xff]
        %v795 = vld [vmem:[%s392 + $0x80] sm:$0xff]
        %v796 = vld [vmem:[%s392 + $0x88] sm:$0xff]
        %v797 = vld [vmem:[%s392 + $0x90] sm:$0xff]
        %v798 = vld [vmem:[%s392 + $0x98] sm:$0xff]
        %v799 = vld [vmem:[%s392 + $0xa0] sm:$0xff]
        %v800 = vld [vmem:[%s392 + $0xa8] sm:$0xff]
        %v801 = vld [vmem:[%s392 + $0xb0] sm:$0xff]
        %v802 = vld [vmem:[%s392 + $0xb8] sm:$0xff]
        %v803 = vld [vmem:[%s392 + $0xc0] sm:$0xff]
        %v804 = vld [vmem:[%s392 + $0xc8] sm:$0xff]
        %v805 = vld [vmem:[%s392 + $0xd0] sm:$0xff]
        %v806 = vld [vmem:[%s392 + $0xd8] sm:$0xff]
        %v807 = vld [vmem:[%s392 + $0xe0] sm:$0xff]
        %v808 = vld [vmem:[%s392 + $0xe8] sm:$0xff]
        %v809 = vld [vmem:[%s392 + $0xf0] sm:$0xff]
        %v810 = vld [vmem:[%s392 + $0xf8] sm:$0xff]
        %v811 = vld [vmem:[%s401] sm:$0x1]
        %v813 = vperm.slane %v811, 0
        %815 = vmatpush.msra.mxu0 %v794
        %816 = vmatpush.msra.mxu0 %v793
        %817 = vmatpush.msra.mxu0 %v792
        %818 = vmatpush.msra.mxu0 %v791
        %819 = vmatpush.msra.mxu0 %v790
        %820 = vmatpush.msra.mxu0 %v789
        %821 = vmatpush.msra.mxu0 %v788
        %822 = vmatpush.msra.mxu0 %v787
        %823 = vmatpush.msra.mxu0 %v786
        %824 = vmatpush.msra.mxu0 %v785
        %825 = vmatpush.msra.mxu0 %v784
        %826 = vmatpush.msra.mxu0 %v783
        %827 = vmatpush.msra.mxu0 %v782
        %828 = vmatpush.msra.mxu0 %v781
        %829 = vmatpush.msra.mxu0 %v780
        %830 = vmatpush.msra.mxu0 %v779
        %831 = vmatmul.f32.gmra.mxu0 %v763
        %v832 = vpop.f32.mrf.mxu0
        %v833 = vadd.f32 %v813, %v832
        %834 = vmatmul.f32.gmra.mxu0 %v765
        %v835 = vpop.f32.mrf.mxu0
        %v836 = vadd.f32 %v813, %v835
        %837 = vmatmul.f32.gmra.mxu0 %v767
        %v838 = vpop.f32.mrf.mxu0
        %v839 = vadd.f32 %v813, %v838
        %840 = vmatmul.f32.gmra.mxu0 %v769
        %v841 = vpop.f32.mrf.mxu0
        %v842 = vadd.f32 %v813, %v841
        %843 = vmatmul.f32.gmra.mxu0 %v771
        %v844 = vpop.f32.mrf.mxu0
        %v845 = vadd.f32 %v813, %v844
        %846 = vmatmul.f32.gmra.mxu0 %v773
        %v847 = vpop.f32.mrf.mxu0
        %v848 = vadd.f32 %v813, %v847
        %849 = vmatmul.f32.gmra.mxu0 %v775
        %v850 = vpop.f32.mrf.mxu0
        %v851 = vadd.f32 %v813, %v850
        %852 = vmatmul.f32.gmra.mxu0 %v777
        %v853 = vpop.f32.mrf.mxu0
        %v854 = vadd.f32 %v813, %v853
        %855 = vdwg.mxu0
        %856 = vmatpush.msra.mxu0 %v810
        %857 = vmatpush.msra.mxu0 %v809
        %858 = vmatpush.msra.mxu0 %v808
        %859 = vmatpush.msra.mxu0 %v807
        %860 = vmatpush.msra.mxu0 %v806
        %861 = vmatpush.msra.mxu0 %v805
        %862 = vmatpush.msra.mxu0 %v804
        %863 = vmatpush.msra.mxu0 %v803
        %864 = vmatpush.msra.mxu0 %v802
        %865 = vmatpush.msra.mxu0 %v801
        %866 = vmatpush.msra.mxu0 %v800
        %867 = vmatpush.msra.mxu0 %v799
        %868 = vmatpush.msra.mxu0 %v798
        %869 = vmatpush.msra.mxu0 %v797
        %870 = vmatpush.msra.mxu0 %v796
        %871 = vmatpush.msra.mxu0 %v795
        %872 = vmatmul.f32.gmra.mxu0 %v764
        %v873 = vpop.f32.mrf.mxu0
        %v874 = vadd.f32 %v833, %v873
        %875 = vmatmul.f32.gmra.mxu0 %v766
        %v876 = vpop.f32.mrf.mxu0
        %v877 = vadd.f32 %v836, %v876
        %878 = vmatmul.f32.gmra.mxu0 %v768
        %v879 = vpop.f32.mrf.mxu0
        %v880 = vadd.f32 %v839, %v879
        %881 = vmatmul.f32.gmra.mxu0 %v770
        %v882 = vpop.f32.mrf.mxu0
        %v883 = vadd.f32 %v842, %v882
        %884 = vmatmul.f32.gmra.mxu0 %v772
        %v885 = vpop.f32.mrf.mxu0
        %v886 = vadd.f32 %v845, %v885
        %887 = vmatmul.f32.gmra.mxu0 %v774
        %v888 = vpop.f32.mrf.mxu0
        %v889 = vadd.f32 %v848, %v888
        %890 = vmatmul.f32.gmra.mxu0 %v776
        %v891 = vpop.f32.mrf.mxu0
        %v892 = vadd.f32 %v851, %v891
        %893 = vmatmul.f32.gmra.mxu0 %v778
        %v894 = vpop.f32.mrf.mxu0
        %v895 = vadd.f32 %v854, %v894
        %896 = vdwg.mxu0
        %v897 = vmul.f32 %v874, 0.5
        %v898 = vmul.f32 %v877, 0.5
        %v899 = vmul.f32 %v880, 0.5
        %v900 = vmul.f32 %v883, 0.5
        %v901 = vmul.f32 %v886, 0.5
        %v902 = vmul.f32 %v889, 0.5
        %v903 = vmul.f32 %v892, 0.5
        %v904 = vmul.f32 %v895, 0.5
        %v905 = vmul.f32 %v874, 0.70710677
        %v906 = vmul.f32 %v877, 0.70710677
        %v907 = vmul.f32 %v880, 0.70710677
        %v908 = vmul.f32 %v883, 0.70710677
        %v909 = vmul.f32 %v886, 0.70710677
        %v910 = vmul.f32 %v889, 0.70710677
        %v911 = vmul.f32 %v892, 0.70710677
        %v912 = vmul.f32 %v895, 0.70710677
        %v913 = vmul.f32 %v905, %v905
        %v914 = vmin.f32 16.0, %v913
        %v915 = vmul.f32 %v914, 2.1237322e-06
        %v916 = vadd.f32 %v915, 0.00028619796
        %v917 = vmul.f32 %v914, %v916
        %v918 = vadd.f32 %v917, 0.0036580483
        %v919 = vmul.f32 %v914, %v918
        %v920 = vadd.f32 %v919, 0.05243302
        %v921 = vmul.f32 %v914, %v920
        %v922 = vadd.f32 %v921, 0.18741608
        %v923 = vmul.f32 %v914, %v922
        %v924 = vadd.f32 %v923, 1.1283791
        %v925 = vmul.f32 %v905, %v924
        %v926 = vmul.f32 %v914, 3.8918573e-05
        %v927 = vadd.f32 %v926, 0.001143296
        %v928 = vmul.f32 %v914, %v927
        %v929 = vadd.f32 %v928, 0.014752088
        %v930 = vmul.f32 %v914, %v929
        %v931 = vadd.f32 %v930, 0.112945676
        %v932 = vmul.f32 %v914, %v931
        %v933 = vadd.f32 %v932, 0.4994258
        %v934 = vmul.f32 %v914, %v933
        %v935 = vadd.f32 %v934, 1.0
        %v936 = vrcp.pop %v935
        %v937 = vmul.f32 %v935, %v936
        %v938 = vsub.f32 1.0, %v937
        %v939 = vmul.f32 %v936, %v938
        %v940 = vadd.f32 %v936, %v939
        %vm941 = vweird.f32 %v935
        %vm942 = vweird.f32 %v936
        %vm943 = vmor %vm941, %vm942
        %v944 = vsel %vm943, %v936, %v940
        %v945 = vand.u32 2147483647, %v935
        %vm946 = vcmp.eq.f32.partialorder %v945, 8.507059e+37
        %v947 = vand.u32 %v935, 2147483648
        %v948 = vor.u32 1.1754944e-38, %v947
        %v949 = vsel %vm946, %v948, %v944
        %v950 = vmul.f32 %v925, %v949
        %v951 = vmin.f32 %v950, 1.0
        %v952 = vmax.f32 %v951, -1.0
        %v953 = vmul.f32 %v906, %v906
        %v954 = vmin.f32 16.0, %v953
        %v955 = vmul.f32 %v954, 2.1237322e-06
        %v956 = vadd.f32 %v955, 0.00028619796
        %v957 = vmul.f32 %v954, %v956
        %v958 = vadd.f32 %v957, 0.0036580483
        %v959 = vmul.f32 %v954, %v958
        %v960 = vadd.f32 %v959, 0.05243302
        %v961 = vmul.f32 %v954, %v960
        %v962 = vadd.f32 %v961, 0.18741608
        %v963 = vmul.f32 %v954, %v962
        %v964 = vadd.f32 %v963, 1.1283791
        %v965 = vmul.f32 %v906, %v964
        %v966 = vmul.f32 %v954, 3.8918573e-05
        %v967 = vadd.f32 %v966, 0.001143296
        %v968 = vmul.f32 %v954, %v967
        %v969 = vadd.f32 %v968, 0.014752088
        %v970 = vmul.f32 %v954, %v969
        %v971 = vadd.f32 %v970, 0.112945676
        %v972 = vmul.f32 %v954, %v971
        %v973 = vadd.f32 %v972, 0.4994258
        %v974 = vmul.f32 %v954, %v973
        %v975 = vadd.f32 %v974, 1.0
        %v976 = vrcp.pop %v975
        %v977 = vmul.f32 %v975, %v976
        %v978 = vsub.f32 1.0, %v977
        %v979 = vmul.f32 %v976, %v978
        %v980 = vadd.f32 %v976, %v979
        %vm981 = vweird.f32 %v975
        %vm982 = vweird.f32 %v976
        %vm983 = vmor %vm981, %vm982
        %v984 = vsel %vm983, %v976, %v980
        %v985 = vand.u32 2147483647, %v975
        %vm986 = vcmp.eq.f32.partialorder %v985, 8.507059e+37
        %v987 = vand.u32 %v975, 2147483648
        %v988 = vor.u32 1.1754944e-38, %v987
        %v989 = vsel %vm986, %v988, %v984
        %v990 = vmul.f32 %v965, %v989
        %v991 = vmin.f32 %v990, 1.0
        %v992 = vmax.f32 %v991, -1.0
        %v993 = vmul.f32 %v907, %v907
        %v994 = vmin.f32 16.0, %v993
        %v995 = vmul.f32 %v994, 2.1237322e-06
        %v996 = vadd.f32 %v995, 0.00028619796
        %v997 = vmul.f32 %v994, %v996
        %v998 = vadd.f32 %v997, 0.0036580483
        %v999 = vmul.f32 %v994, %v998
        %v1000 = vadd.f32 %v999, 0.05243302
        %v1001 = vmul.f32 %v994, %v1000
        %v1002 = vadd.f32 %v1001, 0.18741608
        %v1003 = vmul.f32 %v994, %v1002
        %v1004 = vadd.f32 %v1003, 1.1283791
        %v1005 = vmul.f32 %v907, %v1004
        %v1006 = vmul.f32 %v994, 3.8918573e-05
        %v1007 = vadd.f32 %v1006, 0.001143296
        %v1008 = vmul.f32 %v994, %v1007
        %v1009 = vadd.f32 %v1008, 0.014752088
        %v1010 = vmul.f32 %v994, %v1009
        %v1011 = vadd.f32 %v1010, 0.112945676
        %v1012 = vmul.f32 %v994, %v1011
        %v1013 = vadd.f32 %v1012, 0.4994258
        %v1014 = vmul.f32 %v994, %v1013
        %v1015 = vadd.f32 %v1014, 1.0
        %v1016 = vrcp.pop %v1015
        %v1017 = vmul.f32 %v1015, %v1016
        %v1018 = vsub.f32 1.0, %v1017
        %v1019 = vmul.f32 %v1016, %v1018
        %v1020 = vadd.f32 %v1016, %v1019
        %vm1021 = vweird.f32 %v1015
        %vm1022 = vweird.f32 %v1016
        %vm1023 = vmor %vm1021, %vm1022
        %v1024 = vsel %vm1023, %v1016, %v1020
        %v1025 = vand.u32 2147483647, %v1015
        %vm1026 = vcmp.eq.f32.partialorder %v1025, 8.507059e+37
        %v1027 = vand.u32 %v1015, 2147483648
        %v1028 = vor.u32 1.1754944e-38, %v1027
        %v1029 = vsel %vm1026, %v1028, %v1024
        %v1030 = vmul.f32 %v1005, %v1029
        %v1031 = vmin.f32 %v1030, 1.0
        %v1032 = vmax.f32 %v1031, -1.0
        %v1033 = vmul.f32 %v908, %v908
        %v1034 = vmin.f32 16.0, %v1033
        %v1035 = vmul.f32 %v1034, 2.1237322e-06
        %v1036 = vadd.f32 %v1035, 0.00028619796
        %v1037 = vmul.f32 %v1034, %v1036
        %v1038 = vadd.f32 %v1037, 0.0036580483
        %v1039 = vmul.f32 %v1034, %v1038
        %v1040 = vadd.f32 %v1039, 0.05243302
        %v1041 = vmul.f32 %v1034, %v1040
        %v1042 = vadd.f32 %v1041, 0.18741608
        %v1043 = vmul.f32 %v1034, %v1042
        %v1044 = vadd.f32 %v1043, 1.1283791
        %v1045 = vmul.f32 %v908, %v1044
        %v1046 = vmul.f32 %v1034, 3.8918573e-05
        %v1047 = vadd.f32 %v1046, 0.001143296
        %v1048 = vmul.f32 %v1034, %v1047
        %v1049 = vadd.f32 %v1048, 0.014752088
        %v1050 = vmul.f32 %v1034, %v1049
        %v1051 = vadd.f32 %v1050, 0.112945676
        %v1052 = vmul.f32 %v1034, %v1051
        %v1053 = vadd.f32 %v1052, 0.4994258
        %v1054 = vmul.f32 %v1034, %v1053
        %v1055 = vadd.f32 %v1054, 1.0
        %v1056 = vrcp.pop %v1055
        %v1057 = vmul.f32 %v1055, %v1056
        %v1058 = vsub.f32 1.0, %v1057
        %v1059 = vmul.f32 %v1056, %v1058
        %v1060 = vadd.f32 %v1056, %v1059
        %vm1061 = vweird.f32 %v1055
        %vm1062 = vweird.f32 %v1056
        %vm1063 = vmor %vm1061, %vm1062
        %v1064 = vsel %vm1063, %v1056, %v1060
        %v1065 = vand.u32 2147483647, %v1055
        %vm1066 = vcmp.eq.f32.partialorder %v1065, 8.507059e+37
        %v1067 = vand.u32 %v1055, 2147483648
        %v1068 = vor.u32 1.1754944e-38, %v1067
        %v1069 = vsel %vm1066, %v1068, %v1064
        %v1070 = vmul.f32 %v1045, %v1069
        %v1071 = vmin.f32 %v1070, 1.0
        %v1072 = vmax.f32 %v1071, -1.0
        %v1073 = vmul.f32 %v909, %v909
        %v1074 = vmin.f32 16.0, %v1073
        %v1075 = vmul.f32 %v1074, 2.1237322e-06
        %v1076 = vadd.f32 %v1075, 0.00028619796
        %v1077 = vmul.f32 %v1074, %v1076
        %v1078 = vadd.f32 %v1077, 0.0036580483
        %v1079 = vmul.f32 %v1074, %v1078
        %v1080 = vadd.f32 %v1079, 0.05243302
        %v1081 = vmul.f32 %v1074, %v1080
        %v1082 = vadd.f32 %v1081, 0.18741608
        %v1083 = vmul.f32 %v1074, %v1082
        %v1084 = vadd.f32 %v1083, 1.1283791
        %v1085 = vmul.f32 %v909, %v1084
        %v1086 = vmul.f32 %v1074, 3.8918573e-05
        %v1087 = vadd.f32 %v1086, 0.001143296
        %v1088 = vmul.f32 %v1074, %v1087
        %v1089 = vadd.f32 %v1088, 0.014752088
        %v1090 = vmul.f32 %v1074, %v1089
        %v1091 = vadd.f32 %v1090, 0.112945676
        %v1092 = vmul.f32 %v1074, %v1091
        %v1093 = vadd.f32 %v1092, 0.4994258
        %v1094 = vmul.f32 %v1074, %v1093
        %v1095 = vadd.f32 %v1094, 1.0
        %v1096 = vrcp.pop %v1095
        %v1097 = vmul.f32 %v1095, %v1096
        %v1098 = vsub.f32 1.0, %v1097
        %v1099 = vmul.f32 %v1096, %v1098
        %v1100 = vadd.f32 %v1096, %v1099
        %vm1101 = vweird.f32 %v1095
        %vm1102 = vweird.f32 %v1096
        %vm1103 = vmor %vm1101, %vm1102
        %v1104 = vsel %vm1103, %v1096, %v1100
        %v1105 = vand.u32 2147483647, %v1095
        %vm1106 = vcmp.eq.f32.partialorder %v1105, 8.507059e+37
        %v1107 = vand.u32 %v1095, 2147483648
        %v1108 = vor.u32 1.1754944e-38, %v1107
        %v1109 = vsel %vm1106, %v1108, %v1104
        %v1110 = vmul.f32 %v1085, %v1109
        %v1111 = vmin.f32 %v1110, 1.0
        %v1112 = vmax.f32 %v1111, -1.0
        %v1113 = vmul.f32 %v910, %v910
        %v1114 = vmin.f32 16.0, %v1113
        %v1115 = vmul.f32 %v1114, 2.1237322e-06
        %v1116 = vadd.f32 %v1115, 0.00028619796
        %v1117 = vmul.f32 %v1114, %v1116
        %v1118 = vadd.f32 %v1117, 0.0036580483
        %v1119 = vmul.f32 %v1114, %v1118
        %v1120 = vadd.f32 %v1119, 0.05243302
        %v1121 = vmul.f32 %v1114, %v1120
        %v1122 = vadd.f32 %v1121, 0.18741608
        %v1123 = vmul.f32 %v1114, %v1122
        %v1124 = vadd.f32 %v1123, 1.1283791
        %v1125 = vmul.f32 %v910, %v1124
        %v1126 = vmul.f32 %v1114, 3.8918573e-05
        %v1127 = vadd.f32 %v1126, 0.001143296
        %v1128 = vmul.f32 %v1114, %v1127
        %v1129 = vadd.f32 %v1128, 0.014752088
        %v1130 = vmul.f32 %v1114, %v1129
        %v1131 = vadd.f32 %v1130, 0.112945676
        %v1132 = vmul.f32 %v1114, %v1131
        %v1133 = vadd.f32 %v1132, 0.4994258
        %v1134 = vmul.f32 %v1114, %v1133
        %v1135 = vadd.f32 %v1134, 1.0
        %v1136 = vrcp.pop %v1135
        %v1137 = vmul.f32 %v1135, %v1136
        %v1138 = vsub.f32 1.0, %v1137
        %v1139 = vmul.f32 %v1136, %v1138
        %v1140 = vadd.f32 %v1136, %v1139
        %vm1141 = vweird.f32 %v1135
        %vm1142 = vweird.f32 %v1136
        %vm1143 = vmor %vm1141, %vm1142
        %v1144 = vsel %vm1143, %v1136, %v1140
        %v1145 = vand.u32 2147483647, %v1135
        %vm1146 = vcmp.eq.f32.partialorder %v1145, 8.507059e+37
        %v1147 = vand.u32 %v1135, 2147483648
        %v1148 = vor.u32 1.1754944e-38, %v1147
        %v1149 = vsel %vm1146, %v1148, %v1144
        %v1150 = vmul.f32 %v1125, %v1149
        %v1151 = vmin.f32 %v1150, 1.0
        %v1152 = vmax.f32 %v1151, -1.0
        %v1153 = vmul.f32 %v911, %v911
        %v1154 = vmin.f32 16.0, %v1153
        %v1155 = vmul.f32 %v1154, 2.1237322e-06
        %v1156 = vadd.f32 %v1155, 0.00028619796
        %v1157 = vmul.f32 %v1154, %v1156
        %v1158 = vadd.f32 %v1157, 0.0036580483
        %v1159 = vmul.f32 %v1154, %v1158
        %v1160 = vadd.f32 %v1159, 0.05243302
        %v1161 = vmul.f32 %v1154, %v1160
        %v1162 = vadd.f32 %v1161, 0.18741608
        %v1163 = vmul.f32 %v1154, %v1162
        %v1164 = vadd.f32 %v1163, 1.1283791
        %v1165 = vmul.f32 %v911, %v1164
        %v1166 = vmul.f32 %v1154, 3.8918573e-05
        %v1167 = vadd.f32 %v1166, 0.001143296
        %v1168 = vmul.f32 %v1154, %v1167
        %v1169 = vadd.f32 %v1168, 0.014752088
        %v1170 = vmul.f32 %v1154, %v1169
        %v1171 = vadd.f32 %v1170, 0.112945676
        %v1172 = vmul.f32 %v1154, %v1171
        %v1173 = vadd.f32 %v1172, 0.4994258
        %v1174 = vmul.f32 %v1154, %v1173
        %v1175 = vadd.f32 %v1174, 1.0
        %v1176 = vrcp.pop %v1175
        %v1177 = vmul.f32 %v1175, %v1176
        %v1178 = vsub.f32 1.0, %v1177
        %v1179 = vmul.f32 %v1176, %v1178
        %v1180 = vadd.f32 %v1176, %v1179
        %vm1181 = vweird.f32 %v1175
        %vm1182 = vweird.f32 %v1176
        %vm1183 = vmor %vm1181, %vm1182
        %v1184 = vsel %vm1183, %v1176, %v1180
        %v1185 = vand.u32 2147483647, %v1175
        %vm1186 = vcmp.eq.f32.partialorder %v1185, 8.507059e+37
        %v1187 = vand.u32 %v1175, 2147483648
        %v1188 = vor.u32 1.1754944e-38, %v1187
        %v1189 = vsel %vm1186, %v1188, %v1184
        %v1190 = vmul.f32 %v1165, %v1189
        %v1191 = vmin.f32 %v1190, 1.0
        %v1192 = vmax.f32 %v1191, -1.0
        %v1193 = vmul.f32 %v912, %v912
        %v1194 = vmin.f32 16.0, %v1193
        %v1195 = vmul.f32 %v1194, 2.1237322e-06
        %v1196 = vadd.f32 %v1195, 0.00028619796
        %v1197 = vmul.f32 %v1194, %v1196
        %v1198 = vadd.f32 %v1197, 0.0036580483
        %v1199 = vmul.f32 %v1194, %v1198
        %v1200 = vadd.f32 %v1199, 0.05243302
        %v1201 = vmul.f32 %v1194, %v1200
        %v1202 = vadd.f32 %v1201, 0.18741608
        %v1203 = vmul.f32 %v1194, %v1202
        %v1204 = vadd.f32 %v1203, 1.1283791
        %v1205 = vmul.f32 %v912, %v1204
        %v1206 = vmul.f32 %v1194, 3.8918573e-05
        %v1207 = vadd.f32 %v1206, 0.001143296
        %v1208 = vmul.f32 %v1194, %v1207
        %v1209 = vadd.f32 %v1208, 0.014752088
        %v1210 = vmul.f32 %v1194, %v1209
        %v1211 = vadd.f32 %v1210, 0.112945676
        %v1212 = vmul.f32 %v1194, %v1211
        %v1213 = vadd.f32 %v1212, 0.4994258
        %v1214 = vmul.f32 %v1194, %v1213
        %v1215 = vadd.f32 %v1214, 1.0
        %v1216 = vrcp.pop %v1215
        %v1217 = vmul.f32 %v1215, %v1216
        %v1218 = vsub.f32 1.0, %v1217
        %v1219 = vmul.f32 %v1216, %v1218
        %v1220 = vadd.f32 %v1216, %v1219
        %vm1221 = vweird.f32 %v1215
        %vm1222 = vweird.f32 %v1216
        %vm1223 = vmor %vm1221, %vm1222
        %v1224 = vsel %vm1223, %v1216, %v1220
        %v1225 = vand.u32 2147483647, %v1215
        %vm1226 = vcmp.eq.f32.partialorder %v1225, 8.507059e+37
        %v1227 = vand.u32 %v1215, 2147483648
        %v1228 = vor.u32 1.1754944e-38, %v1227
        %v1229 = vsel %vm1226, %v1228, %v1224
        %v1230 = vmul.f32 %v1205, %v1229
        %v1231 = vmin.f32 %v1230, 1.0
        %v1232 = vmax.f32 %v1231, -1.0
        %v1233 = vadd.f32 %v952, 1.0
        %v1234 = vadd.f32 %v992, 1.0
        %v1235 = vadd.f32 %v1032, 1.0
        %v1236 = vadd.f32 %v1072, 1.0
        %v1237 = vadd.f32 %v1112, 1.0
        %v1238 = vadd.f32 %v1152, 1.0
        %v1239 = vadd.f32 %v1192, 1.0
        %v1240 = vadd.f32 %v1232, 1.0
        %v1241 = vmul.f32 %v897, %v1233
        %v1242 = vmul.f32 %v898, %v1234
        %v1243 = vmul.f32 %v899, %v1235
        %v1244 = vmul.f32 %v900, %v1236
        %v1245 = vmul.f32 %v901, %v1237
        %v1246 = vmul.f32 %v902, %v1238
        %v1247 = vmul.f32 %v903, %v1239
        %v1248 = vmul.f32 %v904, %v1240
        %v1249 = vld [vmem:[#allocation3] sm:$0xff]
        %v1250 = vld [vmem:[#allocation3 + $0x8] sm:$0xff]
        %v1251 = vld [vmem:[#allocation3 + $0x10] sm:$0xff]
        %v1252 = vld [vmem:[#allocation3 + $0x18] sm:$0xff]
        %v1253 = vld [vmem:[#allocation3 + $0x20] sm:$0xff]
        %v1254 = vld [vmem:[#allocation3 + $0x28] sm:$0xff]
        %v1255 = vld [vmem:[#allocation3 + $0x30] sm:$0xff]
        %v1256 = vld [vmem:[#allocation3 + $0x38] sm:$0xff]
        %v1257 = vld [vmem:[#allocation3 + $0x40] sm:$0xff]
        %v1258 = vld [vmem:[#allocation3 + $0x48] sm:$0xff]
        %v1259 = vld [vmem:[#allocation3 + $0x50] sm:$0xff]
        %v1260 = vld [vmem:[#allocation3 + $0x58] sm:$0xff]
        %v1261 = vld [vmem:[#allocation3 + $0x60] sm:$0xff]
        %v1262 = vld [vmem:[#allocation3 + $0x68] sm:$0xff]
        %v1263 = vld [vmem:[#allocation3 + $0x70] sm:$0xff]
        %v1264 = vld [vmem:[#allocation3 + $0x78] sm:$0xff]
        %v1265 = vld [vmem:[%s411] sm:$0xff]
        %v1266 = vld [vmem:[%s411 + $0x8] sm:$0xff]
        %v1267 = vld [vmem:[%s411 + $0x10] sm:$0xff]
        %v1268 = vld [vmem:[%s411 + $0x18] sm:$0xff]
        %v1269 = vld [vmem:[%s411 + $0x20] sm:$0xff]
        %v1270 = vld [vmem:[%s411 + $0x28] sm:$0xff]
        %v1271 = vld [vmem:[%s411 + $0x30] sm:$0xff]
        %v1272 = vld [vmem:[%s411 + $0x38] sm:$0xff]
        %v1273 = vld [vmem:[%s411 + $0x40] sm:$0xff]
        %v1274 = vld [vmem:[%s411 + $0x48] sm:$0xff]
        %v1275 = vld [vmem:[%s411 + $0x50] sm:$0xff]
        %v1276 = vld [vmem:[%s411 + $0x58] sm:$0xff]
        %v1277 = vld [vmem:[%s411 + $0x60] sm:$0xff]
        %v1278 = vld [vmem:[%s411 + $0x68] sm:$0xff]
        %v1279 = vld [vmem:[%s411 + $0x70] sm:$0xff]
        %v1280 = vld [vmem:[%s411 + $0x78] sm:$0xff]
        %v1281 = vld [vmem:[%s411 + $0x80] sm:$0xff]
        %v1282 = vld [vmem:[%s411 + $0x88] sm:$0xff]
        %v1283 = vld [vmem:[%s411 + $0x90] sm:$0xff]
        %v1284 = vld [vmem:[%s411 + $0x98] sm:$0xff]
        %v1285 = vld [vmem:[%s411 + $0xa0] sm:$0xff]
        %v1286 = vld [vmem:[%s411 + $0xa8] sm:$0xff]
        %v1287 = vld [vmem:[%s411 + $0xb0] sm:$0xff]
        %v1288 = vld [vmem:[%s411 + $0xb8] sm:$0xff]
        %v1289 = vld [vmem:[%s411 + $0xc0] sm:$0xff]
        %v1290 = vld [vmem:[%s411 + $0xc8] sm:$0xff]
        %v1291 = vld [vmem:[%s411 + $0xd0] sm:$0xff]
        %v1292 = vld [vmem:[%s411 + $0xd8] sm:$0xff]
        %v1293 = vld [vmem:[%s411 + $0xe0] sm:$0xff]
        %v1294 = vld [vmem:[%s411 + $0xe8] sm:$0xff]
        %v1295 = vld [vmem:[%s411 + $0xf0] sm:$0xff]
        %v1296 = vld [vmem:[%s411 + $0xf8] sm:$0xff]
        %1297 = vmatpush.msra.mxu0 %v1295
        %1298 = vmatpush.msra.mxu0 %v1293
        %1299 = vmatpush.msra.mxu0 %v1291
        %1300 = vmatpush.msra.mxu0 %v1289
        %1301 = vmatpush.msra.mxu0 %v1287
        %1302 = vmatpush.msra.mxu0 %v1285
        %1303 = vmatpush.msra.mxu0 %v1283
        %1304 = vmatpush.msra.mxu0 %v1281
        %1305 = vmatpush.msra.mxu0 %v1279
        %1306 = vmatpush.msra.mxu0 %v1277
        %1307 = vmatpush.msra.mxu0 %v1275
        %1308 = vmatpush.msra.mxu0 %v1273
        %1309 = vmatpush.msra.mxu0 %v1271
        %1310 = vmatpush.msra.mxu0 %v1269
        %1311 = vmatpush.msra.mxu0 %v1267
        %1312 = vmatpush.msra.mxu0 %v1265
        %1313 = vmatmul.f32.gmra.mxu0 %v1241
        %v1314 = vpop.f32.mrf.mxu0
        %v1315 = vadd.f32 0.0, %v1314
        %1316 = vmatmul.f32.gmra.mxu0 %v1242
        %v1317 = vpop.f32.mrf.mxu0
        %v1318 = vadd.f32 0.0, %v1317
        %1319 = vmatmul.f32.gmra.mxu0 %v1243
        %v1320 = vpop.f32.mrf.mxu0
        %v1321 = vadd.f32 0.0, %v1320
        %1322 = vmatmul.f32.gmra.mxu0 %v1244
        %v1323 = vpop.f32.mrf.mxu0
        %v1324 = vadd.f32 0.0, %v1323
        %1325 = vmatmul.f32.gmra.mxu0 %v1245
        %v1326 = vpop.f32.mrf.mxu0
        %v1327 = vadd.f32 0.0, %v1326
        %1328 = vmatmul.f32.gmra.mxu0 %v1246
        %v1329 = vpop.f32.mrf.mxu0
        %v1330 = vadd.f32 0.0, %v1329
        %1331 = vmatmul.f32.gmra.mxu0 %v1247
        %v1332 = vpop.f32.mrf.mxu0
        %v1333 = vadd.f32 0.0, %v1332
        %1334 = vmatmul.f32.gmra.mxu0 %v1248
        %v1335 = vpop.f32.mrf.mxu0
        %v1336 = vadd.f32 0.0, %v1335
        %1337 = vdwg.mxu0
        %1338 = vmatpush.msra.mxu0 %v1296
        %1339 = vmatpush.msra.mxu0 %v1294
        %1340 = vmatpush.msra.mxu0 %v1292
        %1341 = vmatpush.msra.mxu0 %v1290
        %1342 = vmatpush.msra.mxu0 %v1288
        %1343 = vmatpush.msra.mxu0 %v1286
        %1344 = vmatpush.msra.mxu0 %v1284
        %1345 = vmatpush.msra.mxu0 %v1282
        %1346 = vmatpush.msra.mxu0 %v1280
        %1347 = vmatpush.msra.mxu0 %v1278
        %1348 = vmatpush.msra.mxu0 %v1276
        %1349 = vmatpush.msra.mxu0 %v1274
        %1350 = vmatpush.msra.mxu0 %v1272
        %1351 = vmatpush.msra.mxu0 %v1270
        %1352 = vmatpush.msra.mxu0 %v1268
        %1353 = vmatpush.msra.mxu0 %v1266
        %1354 = vmatmul.f32.gmra.mxu0 %v1241
        %v1355 = vpop.f32.mrf.mxu0
        %v1356 = vadd.f32 0.0, %v1355
        %1357 = vmatmul.f32.gmra.mxu0 %v1242
        %v1358 = vpop.f32.mrf.mxu0
        %v1359 = vadd.f32 0.0, %v1358
        %1360 = vmatmul.f32.gmra.mxu0 %v1243
        %v1361 = vpop.f32.mrf.mxu0
        %v1362 = vadd.f32 0.0, %v1361
        %1363 = vmatmul.f32.gmra.mxu0 %v1244
        %v1364 = vpop.f32.mrf.mxu0
        %v1365 = vadd.f32 0.0, %v1364
        %1366 = vmatmul.f32.gmra.mxu0 %v1245
        %v1367 = vpop.f32.mrf.mxu0
        %v1368 = vadd.f32 0.0, %v1367
        %1369 = vmatmul.f32.gmra.mxu0 %v1246
        %v1370 = vpop.f32.mrf.mxu0
        %v1371 = vadd.f32 0.0, %v1370
        %1372 = vmatmul.f32.gmra.mxu0 %v1247
        %v1373 = vpop.f32.mrf.mxu0
        %v1374 = vadd.f32 0.0, %v1373
        %1375 = vmatmul.f32.gmra.mxu0 %v1248
        %v1376 = vpop.f32.mrf.mxu0
        %v1377 = vadd.f32 0.0, %v1376
        %1378 = vdwg.mxu0
        %v1379 = vadd.f32 %v1249, %v1315
        %v1380 = vadd.f32 %v1250, %v1356
        %v1381 = vadd.f32 %v1251, %v1318
        %v1382 = vadd.f32 %v1252, %v1359
        %v1383 = vadd.f32 %v1253, %v1321
        %v1384 = vadd.f32 %v1254, %v1362
        %v1385 = vadd.f32 %v1255, %v1324
        %v1386 = vadd.f32 %v1256, %v1365
        %v1387 = vadd.f32 %v1257, %v1327
        %v1388 = vadd.f32 %v1258, %v1368
        %v1389 = vadd.f32 %v1259, %v1330
        %v1390 = vadd.f32 %v1260, %v1371
        %v1391 = vadd.f32 %v1261, %v1333
        %v1392 = vadd.f32 %v1262, %v1374
        %v1393 = vadd.f32 %v1263, %v1336
        %v1394 = vadd.f32 %v1264, %v1377
        %1395 = vst [vmem:[#allocation3] sm:$0xff] %v1379
        %1396 = vst [vmem:[#allocation3 + $0x8] sm:$0xff] %v1380
        %1397 = vst [vmem:[#allocation3 + $0x10] sm:$0xff] %v1381
        %1398 = vst [vmem:[#allocation3 + $0x18] sm:$0xff] %v1382
        %1399 = vst [vmem:[#allocation3 + $0x20] sm:$0xff] %v1383
        %1400 = vst [vmem:[#allocation3 + $0x28] sm:$0xff] %v1384
        %1401 = vst [vmem:[#allocation3 + $0x30] sm:$0xff] %v1385
        %1402 = vst [vmem:[#allocation3 + $0x38] sm:$0xff] %v1386
        %1403 = vst [vmem:[#allocation3 + $0x40] sm:$0xff] %v1387
        %1404 = vst [vmem:[#allocation3 + $0x48] sm:$0xff] %v1388
        %1405 = vst [vmem:[#allocation3 + $0x50] sm:$0xff] %v1389
        %1406 = vst [vmem:[#allocation3 + $0x58] sm:$0xff] %v1390
        %1407 = vst [vmem:[#allocation3 + $0x60] sm:$0xff] %v1391
        %1408 = vst [vmem:[#allocation3 + $0x68] sm:$0xff] %v1392
        %1409 = vst [vmem:[#allocation3 + $0x70] sm:$0xff] %v1393
        %1410 = vst [vmem:[#allocation3 + $0x78] sm:$0xff] %v1394
        %p1411 = scmp.eq.s32.totalorder %s36, 3
        // Predicated region
        $region77: #{tpu_custom_call.1} parent=47 // pred_check
          %p1412 = pneg %p1411
        $region78: #{tpu_custom_call.1} parent=47 // pred_check_branch
          %1414 = sbr.rel (%p1412) target = $region80
        $region79: #{tpu_custom_call.1} parent=47 // pred_region
          %v1415 = vld [vmem:[#allocation3] sm:$0xff]
          %v1416 = vld [vmem:[#allocation3 + $0x8] sm:$0xff]
          %v1417 = vld [vmem:[#allocation3 + $0x10] sm:$0xff]
          %v1418 = vld [vmem:[#allocation3 + $0x18] sm:$0xff]
          %v1419 = vld [vmem:[#allocation3 + $0x20] sm:$0xff]
          %v1420 = vld [vmem:[#allocation3 + $0x28] sm:$0xff]
          %v1421 = vld [vmem:[#allocation3 + $0x30] sm:$0xff]
          %v1422 = vld [vmem:[#allocation3 + $0x38] sm:$0xff]
          %v1423 = vld [vmem:[#allocation3 + $0x40] sm:$0xff]
          %v1424 = vld [vmem:[#allocation3 + $0x48] sm:$0xff]
          %v1425 = vld [vmem:[#allocation3 + $0x50] sm:$0xff]
          %v1426 = vld [vmem:[#allocation3 + $0x58] sm:$0xff]
          %v1427 = vld [vmem:[#allocation3 + $0x60] sm:$0xff]
          %v1428 = vld [vmem:[#allocation3 + $0x68] sm:$0xff]
          %v1429 = vld [vmem:[#allocation3 + $0x70] sm:$0xff]
          %v1430 = vld [vmem:[#allocation3 + $0x78] sm:$0xff]
          %v1431 = vld [vmem:[%s6] sm:$0x3]
          %v1433 = vperm.slane %v1431, 0
          %v1434 = vperm.slane %v1431, 1
          %v1437 = vadd.f32 %v1415, %v1433
          %v1438 = vadd.f32 %v1416, %v1434
          %v1439 = vadd.f32 %v1417, %v1433
          %v1440 = vadd.f32 %v1418, %v1434
          %v1441 = vadd.f32 %v1419, %v1433
          %v1442 = vadd.f32 %v1420, %v1434
          %v1443 = vadd.f32 %v1421, %v1433
          %v1444 = vadd.f32 %v1422, %v1434
          %v1445 = vadd.f32 %v1423, %v1433
          %v1446 = vadd.f32 %v1424, %v1434
          %v1447 = vadd.f32 %v1425, %v1433
          %v1448 = vadd.f32 %v1426, %v1434
          %v1449 = vadd.f32 %v1427, %v1433
          %v1450 = vadd.f32 %v1428, %v1434
          %v1451 = vadd.f32 %v1429, %v1433
          %v1452 = vadd.f32 %v1430, %v1434
          %1453 = vst [vmem:[%s456] sm:$0xff] %v1437
          %1454 = vst [vmem:[%s456 + $0x8] sm:$0xff] %v1438
          %1455 = vst [vmem:[%s456 + $0x10] sm:$0xff] %v1439
          %1456 = vst [vmem:[%s456 + $0x18] sm:$0xff] %v1440
          %1457 = vst [vmem:[%s456 + $0x20] sm:$0xff] %v1441
          %1458 = vst [vmem:[%s456 + $0x28] sm:$0xff] %v1442
          %1459 = vst [vmem:[%s456 + $0x30] sm:$0xff] %v1443
          %1460 = vst [vmem:[%s456 + $0x38] sm:$0xff] %v1444
          %1461 = vst [vmem:[%s456 + $0x40] sm:$0xff] %v1445
          %1462 = vst [vmem:[%s456 + $0x48] sm:$0xff] %v1446
          %1463 = vst [vmem:[%s456 + $0x50] sm:$0xff] %v1447
          %1464 = vst [vmem:[%s456 + $0x58] sm:$0xff] %v1448
          %1465 = vst [vmem:[%s456 + $0x60] sm:$0xff] %v1449
          %1466 = vst [vmem:[%s456 + $0x68] sm:$0xff] %v1450
          %1467 = vst [vmem:[%s456 + $0x70] sm:$0xff] %v1451
          %1468 = vst [vmem:[%s456 + $0x78] sm:$0xff] %v1452
        $region80: #{tpu_custom_call.1} parent=47 // pred_fallthru
          _
        %s1469 = sand.u32 %s218, 1
        %s1470 = scalar_lea.sflag [#allocation6], %s1469
        %s1471 = sand.u32 %s218, 1
        %s1472 = smul.addr %s1471, 128
        %s1473 = scalar_lea.vmem [#allocation15], %s1472
        // Predicated region
        $region81: #{tpu_custom_call.1} parent=47 // pred_check
          %p1474 = pneg %p228
        $region82: #{tpu_custom_call.1} parent=47 // pred_check_branch
          %1476 = sbr.rel (%p1474) target = $region84
        $region83: #{tpu_custom_call.1} parent=47 // pred_region
          %s1477 = smul.u32 8, %s35
          %1479 = vsyncadd %s1470, 0
          %s1480 = smul.addr %s1477, 2
          %s1481 = smul.addr %s1480, 8
          %s1482 = scalar_lea.hbm %s7, %s1481
          %s1483 = sshll.u32 %s1473, 4
          %s1484 = int_to_ptr.vmem [resolvable:$true] %s1483
          %s1485 = sshll.u32 %s1482, 4
          %s1486 = int_to_ptr.hbm [resolvable:$true] %s1485
          %1491 = dma.vmem_to_hbm [thread:$0]  %s1484, 2048, %s1486, %s1470, 256, 256, 16
        $region84: #{tpu_custom_call.1} parent=47 // pred_fallthru
          _
      $region48: #{tpu_custom_call.1} parent=5 // pred_fallthru
        _
      %p1492 = scmp.le.s32.totalorder 2, %s26
      // Predicated region
      $region85: #{tpu_custom_call.1} parent=5 // pred_check
        %p1493 = pneg %p1492
      $region86: #{tpu_custom_call.1} parent=5 // pred_check_branch
        %1495 = sbr.rel (%p1493) target = $region88
      $region87: #{tpu_custom_call.1} parent=5 // pred_region
        %s1496 = ssub.s32 %s26, 2
        // Predicated region
        $region89: #{tpu_custom_call.1} parent=87 // pred_check
          %p1497 = pneg %p234
        $region90: #{tpu_custom_call.1} parent=87 // pred_check_branch
          %1499 = sbr.rel (%p1497) target = $region92
        $region91: #{tpu_custom_call.1} parent=87 // pred_region
          %s1500 = sand.u32 %s219, 1
          %s1501 = scalar_lea.sflag [#allocation6], %s1500
          %s1502 = sand.u32 %s219, 1
          %s1503 = smul.addr %s1502, 128
          %s1504 = scalar_lea.vmem [#allocation15], %s1503
          %1506 = dma.done %s1501, 2048
        $region92: #{tpu_custom_call.1} parent=87 // pred_fallthru
          _
      $region88: #{tpu_custom_call.1} parent=5 // pred_fallthru
        _
    $region6: #{tpu_custom_call.1} parent=1 // loop_footer
      %s30 = sadd.s32 1, %s26
    $region7: #{tpu_custom_call.1} parent=1 // loop_footer_branch
      %25 = sbr.rel target = $region3
    $region8: #{tpu_custom_call.1} parent=1 // loop_exit
      _
    %1507 = vsyncpa [#allocation5], 1
    %s1508 = scalar_lea.sflag [#allocation5], 1
    %1509 = vsyncpa %s1508, 1
    %1510 = vsyncpa [#allocation8], 1
    %1511 = vsyncpa [#allocation11], 1
    %s1512 = scalar_lea.sflag [#allocation11], 1
    %1513 = vsyncpa %s1512, 1
    %1514 = vsyncpa [#allocation14], 1
    %s1515 = scalar_lea.sflag [#allocation14], 1
    %1516 = vsyncpa %s1515, 1
    %1517 = vsyncpa [#allocation6], 1
    %s1518 = scalar_lea.sflag [#allocation6], 1
    %1519 = vsyncpa %s1518, 1

</llo_original>
